<compile_context>
chip_gen: v7x
topology: tpu7x:2x2x1
jax: 0.10.0
libtpu: 0.0.40
codegen_flags: <defaults>
</compile_context>

<pallas_src>
import math
from functools import partial

import jax
import jax.numpy as jnp
import numpy as np
from jax.experimental import pallas as pl
from jax.experimental.pallas import tpu as pltpu


def _layernorm(x, gamma, beta, eps=1e-5):
    m = jnp.mean(x, axis=-1, keepdims=True)
    var = jnp.mean((x - m) ** 2, axis=-1, keepdims=True)
    return (x - m) * jax.lax.rsqrt(var + eps) * gamma + beta


def transformer_block_kernel(
    key_ref, query_ref, value_ref,
    wq_ref, wk_ref, wv_ref,        # (D, D) block-diagonal, pre-transposed; scale in wq
    wo_ref, bo_ref,                # (D, D) pre-transposed, (1, D)
    g1_ref, beta1_ref,             # (1, D)
    w1_ref, b1_ref,                # (D, H) pre-transposed, (1, H)
    w2_ref, b2_ref,                # (H, D) pre-transposed, (1, D)
    g2_ref, beta2_ref,             # (1, D)
    out_ref,
    *, n_head, head_dim,
):
    bt, S, D = query_ref.shape
    R = bt * S

    q3 = query_ref[...]            # (bt, S, D)
    k3 = key_ref[...]
    v3 = value_ref[...]
    q2 = q3.reshape(R, D)          # merge leading dims -> lane-major 2D slab
    k2 = k3.reshape(R, D)
    v2 = v3.reshape(R, D)

    # --- fused full-width Q/K/V projections (single MXU matmuls, no transposes) ---
    Q = jnp.dot(q2, wq_ref[...], preferred_element_type=jnp.float32)   # scaled
    K = jnp.dot(k2, wk_ref[...], preferred_element_type=jnp.float32)
    V = jnp.dot(v2, wv_ref[...], preferred_element_type=jnp.float32)

    Q3 = Q.reshape(bt, S, D)
    K3 = K.reshape(bt, S, D)
    V3 = V.reshape(bt, S, D)

    wo = wo_ref[...]               # (D, D), rows indexed by input feature
    attn = jnp.zeros((R, D), jnp.float32)

    # --- per-head attention, batched over the batch tile; out-proj fused/accumulated ---
    for h in range(n_head):
        lo = h * head_dim
        hi = lo + head_dim
        qh = Q3[:, :, lo:hi]       # (bt, S, dh)
        kh = K3[:, :, lo:hi]
        vh = V3[:, :, lo:hi]

        s = jnp.einsum('bqd,bkd->bqk', qh, kh,
                       preferred_element_type=jnp.float32)             # (bt, S, S)
        s = s - jnp.max(s, axis=-1, keepdims=True)
        p = jnp.exp(s)
        p = p * pl.reciprocal(jnp.sum(p, axis=-1, keepdims=True), approx=True)
        ctx = jnp.einsum('bqk,bkd->bqd', p, vh,
                         preferred_element_type=jnp.float32)           # (bt, S, dh)

        # accumulate into output projection (replaces concat + big matmul)
        attn = attn + jnp.dot(ctx.reshape(R, head_dim), wo[lo:hi, :],
                              preferred_element_type=jnp.float32)

    attn = attn + bo_ref[...]

    # --- residual + LayerNorm1 (dropout identity in eval) ---
    x1 = attn + q2
    ln1 = _layernorm(x1, g1_ref[...], beta1_ref[...])

    # --- feed-forward: Linear -> ReLU -> Linear (weights pre-transposed) ---
    h1 = jnp.dot(ln1, w1_ref[...], preferred_element_type=jnp.float32) + b1_ref[...]
    h1 = jnp.maximum(h1, 0.0)
    ff = jnp.dot(h1, w2_ref[...], preferred_element_type=jnp.float32) + b2_ref[...]

    # --- residual + LayerNorm2 ---
    x2 = ff + ln1
    ln2 = _layernorm(x2, g2_ref[...], beta2_ref[...])

    out_ref[...] = ln2.reshape(bt, S, D).astype(out_ref.dtype)


def transformer_block(key, query, value, params, *, batch_tile=None, mask=None):
    assert mask is None  # TODO(synk): optional attention mask not implemented
    B, S, D = query.shape
    dh = params["wq"].shape[0]
    n_head = D // dh
    hidden = params["w1"].shape[0]
    bt = B if batch_tile is None else batch_tile
    assert B % bt == 0, "batch_tile must divide B"

    # Host-side weight plumbing (free): block-diagonalize the shared per-head
    # projections, pre-transpose everything, fold the 1/sqrt(dh) scale into Wq.
    scale = 1.0 / math.sqrt(dh)
    eye = jnp.eye(n_head, dtype=jnp.float32)
    wq_bd = jnp.kron(eye, params["wq"].T) * scale     # (D, D)
    wk_bd = jnp.kron(eye, params["wk"].T)             # (D, D)
    wv_bd = jnp.kron(eye, params["wv"].T)             # (D, D)
    woT = params["wo"].T                              # (D, D)
    w1T = params["w1"].T                              # (D, hidden)
    w2T = params["w2"].T                              # (hidden, D)

    tok = pl.BlockSpec((bt, S, D), lambda i: (i, 0, 0))

    def full(shape):
        return pl.BlockSpec(shape, lambda i, _n=len(shape): (0,) * _n)

    kernel = partial(transformer_block_kernel, n_head=n_head, head_dim=dh)

    return pl.pallas_call(
        kernel,
        out_shape=jax.ShapeDtypeStruct((B, S, D), jnp.float32),
        grid_spec=pltpu.PrefetchScalarGridSpec(
            num_scalar_prefetch=0,
            grid=(B // bt,),
            in_specs=[
                tok, tok, tok,                          # key, query, value
                full((D, D)), full((D, D)), full((D, D)),   # wq_bd, wk_bd, wv_bd
                full((D, D)), full((1, D)),             # woT, bo
                full((1, D)), full((1, D)),             # gamma1, beta1
                full((D, hidden)), full((1, hidden)),   # w1T, b1
                full((hidden, D)), full((1, D)),        # w2T, b2
                full((1, D)), full((1, D)),             # gamma2, beta2
            ],
            out_specs=pl.BlockSpec((bt, S, D), lambda i: (i, 0, 0)),
        ),
        compiler_params=pltpu.CompilerParams(
            dimension_semantics=("parallel",),
        ),
    )(
        key, query, value,
        wq_bd, wk_bd, wv_bd,
        woT, params["bo"],
        params["g1"], params["beta1"],
        w1T, params["b1"],
        w2T, params["b2"],
        params["g2"], params["beta2"],
    )


def transformer_block_ref(key, query, value, params):
    """Pure-JAX reference with the exact PyTorch semantics (for validation)."""
    B, S, D = query.shape
    dh = params["wq"].shape[0]
    H = D // dh
    scale = 1.0 / math.sqrt(dh)

    k = key.reshape(B, S, H, dh)
    q = query.reshape(B, S, H, dh)
    v = value.reshape(B, S, H, dh)
    Q = jnp.einsum("bshd,ed->bshe", q, params["wq"]).transpose(0, 2, 1, 3)
    K = jnp.einsum("bshd,ed->bshe", k, params["wk"]).transpose(0, 2, 1, 3)
    V = jnp.einsum("bshd,ed->bshe", v, params["wv"]).transpose(0, 2, 1, 3)
    scores = jnp.einsum("bhqd,bhkd->bhqk", Q, K) * scale
    attn = jax.nn.softmax(scores, axis=-1)
    ctx = jnp.einsum("bhqk,bhkd->bhqd", attn, V).transpose(0, 2, 1, 3).reshape(B, S, D)
    attn_out = ctx @ params["wo"].T + params["bo"][0]

    x1 = attn_out + query
    ln1 = _layernorm(x1, params["g1"][0], params["beta1"][0])
    h1 = jnp.maximum(ln1 @ params["w1"].T + params["b1"][0], 0.0)
    ff = h1 @ params["w2"].T + params["b2"][0]
    x2 = ff + ln1
    return _layernorm(x2, params["g2"][0], params["beta2"][0])


def make_params(key, embed_dim, hidden_size, n_head):
    dh = embed_dim // n_head
    ks = jax.random.split(key, 12)
    r = lambda k, shape, s=0.05: (jax.random.normal(k, shape, jnp.float32) * s)
    return {
        "wq": r(ks[0], (dh, dh)),
        "wk": r(ks[1], (dh, dh)),
        "wv": r(ks[2], (dh, dh)),
        "wo": r(ks[3], (embed_dim, embed_dim)),
        "bo": r(ks[4], (1, embed_dim)),
        "g1": 1.0 + r(ks[5], (1, embed_dim)),
        "beta1": r(ks[6], (1, embed_dim)),
        "w1": r(ks[7], (hidden_size, embed_dim)),
        "b1": r(ks[8], (1, hidden_size)),
        "w2": r(ks[9], (embed_dim, hidden_size)),
        "b2": r(ks[10], (1, embed_dim)),
        "g2": 1.0 + r(ks[11], (1, embed_dim)),
        "beta2": r(jax.random.fold_in(key, 99), (1, embed_dim)),
    }


if __name__ == "__main__":
    B, S, D, HIDDEN, N_HEAD = 2, 8, 32, 64, 4

    root = jax.random.PRNGKey(0)
    kk, kq, kv, kp = jax.random.split(root, 4)
    key_in = jax.random.normal(kk, (B, S, D), jnp.float32)
    query_in = jax.random.normal(kq, (B, S, D), jnp.float32)
    value_in = jax.random.normal(kv, (B, S, D), jnp.float32)
    params = make_params(kp, D, HIDDEN, N_HEAD)

    out = transformer_block(key_in, query_in, value_in, params)
    out = jax.block_until_ready(out)

    ref = jax.block_until_ready(transformer_block_ref(key_in, query_in, value_in, params))
    # Tolerance loosened slightly vs 1e-4 to cover the EUP approximate reciprocal
    # in the softmax denominator; everything else is f32-exact.
    np.testing.assert_allclose(np.asarray(out), np.asarray(ref), atol=1e-3, rtol=1e-3)

    print("KERNEL_OK")
</pallas_src>

<mosaic_0001>
module attributes {stable_mosaic.version = 11 : i64} {
  func.func @transformer_block_kernel(%arg0: i32, %arg1: memref<2x8x32xf32, #tpu.memory_space<vmem>>, %arg2: memref<2x8x32xf32, #tpu.memory_space<vmem>>, %arg3: memref<2x8x32xf32, #tpu.memory_space<vmem>>, %arg4: memref<32x32xf32, #tpu.memory_space<vmem>>, %arg5: memref<32x32xf32, #tpu.memory_space<vmem>>, %arg6: memref<32x32xf32, #tpu.memory_space<vmem>>, %arg7: memref<32x32xf32, #tpu.memory_space<vmem>>, %arg8: memref<1x32xf32, #tpu.memory_space<vmem>>, %arg9: memref<1x32xf32, #tpu.memory_space<vmem>>, %arg10: memref<1x32xf32, #tpu.memory_space<vmem>>, %arg11: memref<32x64xf32, #tpu.memory_space<vmem>>, %arg12: memref<1x64xf32, #tpu.memory_space<vmem>>, %arg13: memref<64x32xf32, #tpu.memory_space<vmem>>, %arg14: memref<1x32xf32, #tpu.memory_space<vmem>>, %arg15: memref<1x32xf32, #tpu.memory_space<vmem>>, %arg16: memref<1x32xf32, #tpu.memory_space<vmem>>, %arg17: memref<2x8x32xf32, #tpu.memory_space<vmem>>) attributes {dimension_semantics = [#tpu.dimension_semantics<parallel>], iteration_bounds = array<i64: 1>, scalar_prefetch = 0 : i64, scratch_operands = 0 : i64, tpu.core_type = #tpu.core_type<tc>, window_params = [{transform_indices = @transform_0, window_bounds = array<i64: 2, 8, 32>}, {transform_indices = @transform_1, window_bounds = array<i64: 2, 8, 32>}, {transform_indices = @transform_2, window_bounds = array<i64: 2, 8, 32>}, {pipeline_mode = #tpu.pipeline_mode<synchronous>, transform_indices = @transform_3, window_bounds = array<i64: 32, 32>}, {pipeline_mode = #tpu.pipeline_mode<synchronous>, transform_indices = @transform_4, window_bounds = array<i64: 32, 32>}, {pipeline_mode = #tpu.pipeline_mode<synchronous>, transform_indices = @transform_5, window_bounds = array<i64: 32, 32>}, {pipeline_mode = #tpu.pipeline_mode<synchronous>, transform_indices = @transform_6, window_bounds = array<i64: 32, 32>}, {pipeline_mode = #tpu.pipeline_mode<synchronous>, transform_indices = @transform_7, window_bounds = array<i64: 1, 32>}, {pipeline_mode = #tpu.pipeline_mode<synchronous>, transform_indices = @transform_8, window_bounds = array<i64: 1, 32>}, {pipeline_mode = #tpu.pipeline_mode<synchronous>, transform_indices = @transform_9, window_bounds = array<i64: 1, 32>}, {pipeline_mode = #tpu.pipeline_mode<synchronous>, transform_indices = @transform_10, window_bounds = array<i64: 32, 64>}, {pipeline_mode = #tpu.pipeline_mode<synchronous>, transform_indices = @transform_11, window_bounds = array<i64: 1, 64>}, {pipeline_mode = #tpu.pipeline_mode<synchronous>, transform_indices = @transform_12, window_bounds = array<i64: 64, 32>}, {pipeline_mode = #tpu.pipeline_mode<synchronous>, transform_indices = @transform_13, window_bounds = array<i64: 1, 32>}, {pipeline_mode = #tpu.pipeline_mode<synchronous>, transform_indices = @transform_14, window_bounds = array<i64: 1, 32>}, {pipeline_mode = #tpu.pipeline_mode<synchronous>, transform_indices = @transform_15, window_bounds = array<i64: 1, 32>}, {transform_indices = @transform_16, window_bounds = array<i64: 2, 8, 32>}]} {
    %c0 = arith.constant 0 : index
    %c0_0 = arith.constant 0 : index
    %c0_1 = arith.constant 0 : index
    %0 = vector.load %arg2[%c0, %c0_0, %c0_1] : memref<2x8x32xf32, #tpu.memory_space<vmem>>, vector<2x8x32xf32>
    %c0_2 = arith.constant 0 : index
    %c0_3 = arith.constant 0 : index
    %c0_4 = arith.constant 0 : index
    %1 = vector.load %arg1[%c0_2, %c0_3, %c0_4] : memref<2x8x32xf32, #tpu.memory_space<vmem>>, vector<2x8x32xf32>
    %c0_5 = arith.constant 0 : index
    %c0_6 = arith.constant 0 : index
    %c0_7 = arith.constant 0 : index
    %2 = vector.load %arg3[%c0_5, %c0_6, %c0_7] : memref<2x8x32xf32, #tpu.memory_space<vmem>>, vector<2x8x32xf32>
    %3 = vector.shape_cast %0 : vector<2x8x32xf32> to vector<16x32xf32>
    %4 = vector.shape_cast %1 : vector<2x8x32xf32> to vector<16x32xf32>
    %5 = vector.shape_cast %2 : vector<2x8x32xf32> to vector<16x32xf32>
    %c0_8 = arith.constant 0 : index
    %c0_9 = arith.constant 0 : index
    %6 = vector.load %arg4[%c0_8, %c0_9] : memref<32x32xf32, #tpu.memory_space<vmem>>, vector<32x32xf32>
    %cst = arith.constant dense<0.000000e+00> : vector<16x32xf32>
    %7 = tpu.matmul %3, %6, %cst {dimension_numbers = #tpu.dot_dimension_numbers<[1], [0], [0], [1], [0, 0, 1, 1], [], []>} : vector<16x32xf32>, vector<32x32xf32>, vector<16x32xf32> -> vector<16x32xf32>
    %c0_10 = arith.constant 0 : index
    %c0_11 = arith.constant 0 : index
    %8 = vector.load %arg5[%c0_10, %c0_11] : memref<32x32xf32, #tpu.memory_space<vmem>>, vector<32x32xf32>
    %cst_12 = arith.constant dense<0.000000e+00> : vector<16x32xf32>
    %9 = tpu.matmul %4, %8, %cst_12 {dimension_numbers = #tpu.dot_dimension_numbers<[1], [0], [0], [1], [0, 0, 1, 1], [], []>} : vector<16x32xf32>, vector<32x32xf32>, vector<16x32xf32> -> vector<16x32xf32>
    %c0_13 = arith.constant 0 : index
    %c0_14 = arith.constant 0 : index
    %10 = vector.load %arg6[%c0_13, %c0_14] : memref<32x32xf32, #tpu.memory_space<vmem>>, vector<32x32xf32>
    %cst_15 = arith.constant dense<0.000000e+00> : vector<16x32xf32>
    %11 = tpu.matmul %5, %10, %cst_15 {dimension_numbers = #tpu.dot_dimension_numbers<[1], [0], [0], [1], [0, 0, 1, 1], [], []>} : vector<16x32xf32>, vector<32x32xf32>, vector<16x32xf32> -> vector<16x32xf32>
    %12 = vector.shape_cast %7 : vector<16x32xf32> to vector<2x8x32xf32>
    %13 = vector.shape_cast %9 : vector<16x32xf32> to vector<2x8x32xf32>
    %14 = vector.shape_cast %11 : vector<16x32xf32> to vector<2x8x32xf32>
    %c0_16 = arith.constant 0 : index
    %c0_17 = arith.constant 0 : index
    %15 = vector.load %arg7[%c0_16, %c0_17] : memref<32x32xf32, #tpu.memory_space<vmem>>, vector<32x32xf32>
    %cst_18 = arith.constant 0.000000e+00 : f32
    %16 = vector.broadcast %cst_18 : f32 to vector<16x32xf32>
    %17 = vector.extract_strided_slice %12 {offsets = [0, 0, 0], sizes = [2, 8, 8], strides = [1, 1, 1]} : vector<2x8x32xf32> to vector<2x8x8xf32>
    %18 = vector.extract_strided_slice %13 {offsets = [0, 0, 0], sizes = [2, 8, 8], strides = [1, 1, 1]} : vector<2x8x32xf32> to vector<2x8x8xf32>
    %19 = vector.extract_strided_slice %14 {offsets = [0, 0, 0], sizes = [2, 8, 8], strides = [1, 1, 1]} : vector<2x8x32xf32> to vector<2x8x8xf32>
    "tpu.trace_start"() <{level = 10 : i32, message = "bqd,bkd->bqk"}> : () -> ()
    %cst_19 = arith.constant dense<0.000000e+00> : vector<2x8x8xf32>
    %20 = tpu.matmul %17, %18, %cst_19 {dimension_numbers = #tpu.dot_dimension_numbers<[2], [2], [1], [1], [0, 0, 0, 1, 1, 1], [0], [0]>} : vector<2x8x8xf32>, vector<2x8x8xf32>, vector<2x8x8xf32> -> vector<2x8x8xf32>
    "tpu.trace_stop"() : () -> ()
    %cst_20 = arith.constant dense<0xFF800000> : vector<2x8xf32>
    %21 = vector.multi_reduction <maximumf>, %20, %cst_20 [2] : vector<2x8x8xf32> to vector<2x8xf32>
    %22 = vector.shape_cast %21 : vector<2x8xf32> to vector<2x8x1xf32>
    %23 = vector.broadcast %22 : vector<2x8x1xf32> to vector<2x8x8xf32>
    %24 = arith.subf %20, %23 : vector<2x8x8xf32>
    %25 = math.exp %24 : vector<2x8x8xf32>
    %cst_21 = arith.constant dense<0.000000e+00> : vector<2x8xf32>
    %26 = vector.multi_reduction <add>, %25, %cst_21 [2] : vector<2x8x8xf32> to vector<2x8xf32>
    %27 = vector.shape_cast %26 : vector<2x8xf32> to vector<2x8x1xf32>
    %28 = tpu.reciprocal %27 {approx = true} : vector<2x8x1xf32> -> vector<2x8x1xf32>
    %29 = vector.broadcast %28 : vector<2x8x1xf32> to vector<2x8x8xf32>
    %30 = arith.mulf %25, %29 : vector<2x8x8xf32>
    "tpu.trace_start"() <{level = 10 : i32, message = "bqk,bkd->bqd"}> : () -> ()
    %cst_22 = arith.constant dense<0.000000e+00> : vector<2x8x8xf32>
    %31 = tpu.matmul %30, %19, %cst_22 {dimension_numbers = #tpu.dot_dimension_numbers<[2], [1], [1], [2], [0, 0, 0, 1, 1, 2], [0], [0]>} : vector<2x8x8xf32>, vector<2x8x8xf32>, vector<2x8x8xf32> -> vector<2x8x8xf32>
    "tpu.trace_stop"() : () -> ()
    %32 = vector.shape_cast %31 : vector<2x8x8xf32> to vector<16x8xf32>
    %33 = vector.extract_strided_slice %15 {offsets = [0, 0], sizes = [8, 32], strides = [1, 1]} : vector<32x32xf32> to vector<8x32xf32>
    %cst_23 = arith.constant dense<0.000000e+00> : vector<16x32xf32>
    %34 = tpu.matmul %32, %33, %cst_23 {dimension_numbers = #tpu.dot_dimension_numbers<[1], [0], [0], [1], [0, 0, 1, 1], [], []>} : vector<16x8xf32>, vector<8x32xf32>, vector<16x32xf32> -> vector<16x32xf32>
    %35 = arith.addf %16, %34 : vector<16x32xf32>
    %36 = vector.extract_strided_slice %12 {offsets = [0, 0, 8], sizes = [2, 8, 8], strides = [1, 1, 1]} : vector<2x8x32xf32> to vector<2x8x8xf32>
    %37 = vector.extract_strided_slice %13 {offsets = [0, 0, 8], sizes = [2, 8, 8], strides = [1, 1, 1]} : vector<2x8x32xf32> to vector<2x8x8xf32>
    %38 = vector.extract_strided_slice %14 {offsets = [0, 0, 8], sizes = [2, 8, 8], strides = [1, 1, 1]} : vector<2x8x32xf32> to vector<2x8x8xf32>
    "tpu.trace_start"() <{level = 10 : i32, message = "bqd,bkd->bqk"}> : () -> ()
    %cst_24 = arith.constant dense<0.000000e+00> : vector<2x8x8xf32>
    %39 = tpu.matmul %36, %37, %cst_24 {dimension_numbers = #tpu.dot_dimension_numbers<[2], [2], [1], [1], [0, 0, 0, 1, 1, 1], [0], [0]>} : vector<2x8x8xf32>, vector<2x8x8xf32>, vector<2x8x8xf32> -> vector<2x8x8xf32>
    "tpu.trace_stop"() : () -> ()
    %cst_25 = arith.constant dense<0xFF800000> : vector<2x8xf32>
    %40 = vector.multi_reduction <maximumf>, %39, %cst_25 [2] : vector<2x8x8xf32> to vector<2x8xf32>
    %41 = vector.shape_cast %40 : vector<2x8xf32> to vector<2x8x1xf32>
    %42 = vector.broadcast %41 : vector<2x8x1xf32> to vector<2x8x8xf32>
    %43 = arith.subf %39, %42 : vector<2x8x8xf32>
    %44 = math.exp %43 : vector<2x8x8xf32>
    %cst_26 = arith.constant dense<0.000000e+00> : vector<2x8xf32>
    %45 = vector.multi_reduction <add>, %44, %cst_26 [2] : vector<2x8x8xf32> to vector<2x8xf32>
    %46 = vector.shape_cast %45 : vector<2x8xf32> to vector<2x8x1xf32>
    %47 = tpu.reciprocal %46 {approx = true} : vector<2x8x1xf32> -> vector<2x8x1xf32>
    %48 = vector.broadcast %47 : vector<2x8x1xf32> to vector<2x8x8xf32>
    %49 = arith.mulf %44, %48 : vector<2x8x8xf32>
    "tpu.trace_start"() <{level = 10 : i32, message = "bqk,bkd->bqd"}> : () -> ()
    %cst_27 = arith.constant dense<0.000000e+00> : vector<2x8x8xf32>
    %50 = tpu.matmul %49, %38, %cst_27 {dimension_numbers = #tpu.dot_dimension_numbers<[2], [1], [1], [2], [0, 0, 0, 1, 1, 2], [0], [0]>} : vector<2x8x8xf32>, vector<2x8x8xf32>, vector<2x8x8xf32> -> vector<2x8x8xf32>
    "tpu.trace_stop"() : () -> ()
    %51 = vector.shape_cast %50 : vector<2x8x8xf32> to vector<16x8xf32>
    %52 = vector.extract_strided_slice %15 {offsets = [8, 0], sizes = [8, 32], strides = [1, 1]} : vector<32x32xf32> to vector<8x32xf32>
    %cst_28 = arith.constant dense<0.000000e+00> : vector<16x32xf32>
    %53 = tpu.matmul %51, %52, %cst_28 {dimension_numbers = #tpu.dot_dimension_numbers<[1], [0], [0], [1], [0, 0, 1, 1], [], []>} : vector<16x8xf32>, vector<8x32xf32>, vector<16x32xf32> -> vector<16x32xf32>
    %54 = arith.addf %35, %53 : vector<16x32xf32>
    %55 = vector.extract_strided_slice %12 {offsets = [0, 0, 16], sizes = [2, 8, 8], strides = [1, 1, 1]} : vector<2x8x32xf32> to vector<2x8x8xf32>
    %56 = vector.extract_strided_slice %13 {offsets = [0, 0, 16], sizes = [2, 8, 8], strides = [1, 1, 1]} : vector<2x8x32xf32> to vector<2x8x8xf32>
    %57 = vector.extract_strided_slice %14 {offsets = [0, 0, 16], sizes = [2, 8, 8], strides = [1, 1, 1]} : vector<2x8x32xf32> to vector<2x8x8xf32>
    "tpu.trace_start"() <{level = 10 : i32, message = "bqd,bkd->bqk"}> : () -> ()
    %cst_29 = arith.constant dense<0.000000e+00> : vector<2x8x8xf32>
    %58 = tpu.matmul %55, %56, %cst_29 {dimension_numbers = #tpu.dot_dimension_numbers<[2], [2], [1], [1], [0, 0, 0, 1, 1, 1], [0], [0]>} : vector<2x8x8xf32>, vector<2x8x8xf32>, vector<2x8x8xf32> -> vector<2x8x8xf32>
    "tpu.trace_stop"() : () -> ()
    %cst_30 = arith.constant dense<0xFF800000> : vector<2x8xf32>
    %59 = vector.multi_reduction <maximumf>, %58, %cst_30 [2] : vector<2x8x8xf32> to vector<2x8xf32>
    %60 = vector.shape_cast %59 : vector<2x8xf32> to vector<2x8x1xf32>
    %61 = vector.broadcast %60 : vector<2x8x1xf32> to vector<2x8x8xf32>
    %62 = arith.subf %58, %61 : vector<2x8x8xf32>
    %63 = math.exp %62 : vector<2x8x8xf32>
    %cst_31 = arith.constant dense<0.000000e+00> : vector<2x8xf32>
    %64 = vector.multi_reduction <add>, %63, %cst_31 [2] : vector<2x8x8xf32> to vector<2x8xf32>
    %65 = vector.shape_cast %64 : vector<2x8xf32> to vector<2x8x1xf32>
    %66 = tpu.reciprocal %65 {approx = true} : vector<2x8x1xf32> -> vector<2x8x1xf32>
    %67 = vector.broadcast %66 : vector<2x8x1xf32> to vector<2x8x8xf32>
    %68 = arith.mulf %63, %67 : vector<2x8x8xf32>
    "tpu.trace_start"() <{level = 10 : i32, message = "bqk,bkd->bqd"}> : () -> ()
    %cst_32 = arith.constant dense<0.000000e+00> : vector<2x8x8xf32>
    %69 = tpu.matmul %68, %57, %cst_32 {dimension_numbers = #tpu.dot_dimension_numbers<[2], [1], [1], [2], [0, 0, 0, 1, 1, 2], [0], [0]>} : vector<2x8x8xf32>, vector<2x8x8xf32>, vector<2x8x8xf32> -> vector<2x8x8xf32>
    "tpu.trace_stop"() : () -> ()
    %70 = vector.shape_cast %69 : vector<2x8x8xf32> to vector<16x8xf32>
    %71 = vector.extract_strided_slice %15 {offsets = [16, 0], sizes = [8, 32], strides = [1, 1]} : vector<32x32xf32> to vector<8x32xf32>
    %cst_33 = arith.constant dense<0.000000e+00> : vector<16x32xf32>
    %72 = tpu.matmul %70, %71, %cst_33 {dimension_numbers = #tpu.dot_dimension_numbers<[1], [0], [0], [1], [0, 0, 1, 1], [], []>} : vector<16x8xf32>, vector<8x32xf32>, vector<16x32xf32> -> vector<16x32xf32>
    %73 = arith.addf %54, %72 : vector<16x32xf32>
    %74 = vector.extract_strided_slice %12 {offsets = [0, 0, 24], sizes = [2, 8, 8], strides = [1, 1, 1]} : vector<2x8x32xf32> to vector<2x8x8xf32>
    %75 = vector.extract_strided_slice %13 {offsets = [0, 0, 24], sizes = [2, 8, 8], strides = [1, 1, 1]} : vector<2x8x32xf32> to vector<2x8x8xf32>
    %76 = vector.extract_strided_slice %14 {offsets = [0, 0, 24], sizes = [2, 8, 8], strides = [1, 1, 1]} : vector<2x8x32xf32> to vector<2x8x8xf32>
    "tpu.trace_start"() <{level = 10 : i32, message = "bqd,bkd->bqk"}> : () -> ()
    %cst_34 = arith.constant dense<0.000000e+00> : vector<2x8x8xf32>
    %77 = tpu.matmul %74, %75, %cst_34 {dimension_numbers = #tpu.dot_dimension_numbers<[2], [2], [1], [1], [0, 0, 0, 1, 1, 1], [0], [0]>} : vector<2x8x8xf32>, vector<2x8x8xf32>, vector<2x8x8xf32> -> vector<2x8x8xf32>
    "tpu.trace_stop"() : () -> ()
    %cst_35 = arith.constant dense<0xFF800000> : vector<2x8xf32>
    %78 = vector.multi_reduction <maximumf>, %77, %cst_35 [2] : vector<2x8x8xf32> to vector<2x8xf32>
    %79 = vector.shape_cast %78 : vector<2x8xf32> to vector<2x8x1xf32>
    %80 = vector.broadcast %79 : vector<2x8x1xf32> to vector<2x8x8xf32>
    %81 = arith.subf %77, %80 : vector<2x8x8xf32>
    %82 = math.exp %81 : vector<2x8x8xf32>
    %cst_36 = arith.constant dense<0.000000e+00> : vector<2x8xf32>
    %83 = vector.multi_reduction <add>, %82, %cst_36 [2] : vector<2x8x8xf32> to vector<2x8xf32>
    %84 = vector.shape_cast %83 : vector<2x8xf32> to vector<2x8x1xf32>
    %85 = tpu.reciprocal %84 {approx = true} : vector<2x8x1xf32> -> vector<2x8x1xf32>
    %86 = vector.broadcast %85 : vector<2x8x1xf32> to vector<2x8x8xf32>
    %87 = arith.mulf %82, %86 : vector<2x8x8xf32>
    "tpu.trace_start"() <{level = 10 : i32, message = "bqk,bkd->bqd"}> : () -> ()
    %cst_37 = arith.constant dense<0.000000e+00> : vector<2x8x8xf32>
    %88 = tpu.matmul %87, %76, %cst_37 {dimension_numbers = #tpu.dot_dimension_numbers<[2], [1], [1], [2], [0, 0, 0, 1, 1, 2], [0], [0]>} : vector<2x8x8xf32>, vector<2x8x8xf32>, vector<2x8x8xf32> -> vector<2x8x8xf32>
    "tpu.trace_stop"() : () -> ()
    %89 = vector.shape_cast %88 : vector<2x8x8xf32> to vector<16x8xf32>
    %90 = vector.extract_strided_slice %15 {offsets = [24, 0], sizes = [8, 32], strides = [1, 1]} : vector<32x32xf32> to vector<8x32xf32>
    %cst_38 = arith.constant dense<0.000000e+00> : vector<16x32xf32>
    %91 = tpu.matmul %89, %90, %cst_38 {dimension_numbers = #tpu.dot_dimension_numbers<[1], [0], [0], [1], [0, 0, 1, 1], [], []>} : vector<16x8xf32>, vector<8x32xf32>, vector<16x32xf32> -> vector<16x32xf32>
    %92 = arith.addf %73, %91 : vector<16x32xf32>
    %c0_39 = arith.constant 0 : index
    %c0_40 = arith.constant 0 : index
    %93 = vector.load %arg8[%c0_39, %c0_40] : memref<1x32xf32, #tpu.memory_space<vmem>>, vector<1x32xf32>
    %94 = vector.broadcast %93 : vector<1x32xf32> to vector<16x32xf32>
    %95 = arith.addf %92, %94 : vector<16x32xf32>
    %96 = arith.addf %95, %3 : vector<16x32xf32>
    %c0_41 = arith.constant 0 : index
    %c0_42 = arith.constant 0 : index
    %97 = vector.load %arg9[%c0_41, %c0_42] : memref<1x32xf32, #tpu.memory_space<vmem>>, vector<1x32xf32>
    %c0_43 = arith.constant 0 : index
    %c0_44 = arith.constant 0 : index
    %98 = vector.load %arg10[%c0_43, %c0_44] : memref<1x32xf32, #tpu.memory_space<vmem>>, vector<1x32xf32>
    %cst_45 = arith.constant dense<0.000000e+00> : vector<16xf32>
    %99 = vector.multi_reduction <add>, %96, %cst_45 [1] : vector<16x32xf32> to vector<16xf32>
    %100 = vector.shape_cast %99 : vector<16xf32> to vector<16x1xf32>
    %cst_46 = arith.constant 3.200000e+01 : f32
    %101 = vector.broadcast %cst_46 : f32 to vector<16x1xf32>
    %102 = arith.divf %100, %101 : vector<16x1xf32>
    %103 = vector.broadcast %102 : vector<16x1xf32> to vector<16x32xf32>
    %104 = arith.subf %96, %103 : vector<16x32xf32>
    %105 = arith.mulf %104, %104 : vector<16x32xf32>
    %cst_47 = arith.constant dense<0.000000e+00> : vector<16xf32>
    %106 = vector.multi_reduction <add>, %105, %cst_47 [1] : vector<16x32xf32> to vector<16xf32>
    %107 = vector.shape_cast %106 : vector<16xf32> to vector<16x1xf32>
    %cst_48 = arith.constant 3.200000e+01 : f32
    %108 = vector.broadcast %cst_48 : f32 to vector<16x1xf32>
    %109 = arith.divf %107, %108 : vector<16x1xf32>
    %110 = vector.broadcast %102 : vector<16x1xf32> to vector<16x32xf32>
    %111 = arith.subf %96, %110 : vector<16x32xf32>
    %cst_49 = arith.constant 9.99999974E-6 : f32
    %112 = vector.broadcast %cst_49 : f32 to vector<16x1xf32>
    %113 = arith.addf %109, %112 : vector<16x1xf32>
    %114 = math.rsqrt %113 : vector<16x1xf32>
    %115 = vector.broadcast %114 : vector<16x1xf32> to vector<16x32xf32>
    %116 = arith.mulf %111, %115 : vector<16x32xf32>
    %117 = vector.broadcast %97 : vector<1x32xf32> to vector<16x32xf32>
    %118 = arith.mulf %116, %117 : vector<16x32xf32>
    %119 = vector.broadcast %98 : vector<1x32xf32> to vector<16x32xf32>
    %120 = arith.addf %118, %119 : vector<16x32xf32>
    %c0_50 = arith.constant 0 : index
    %c0_51 = arith.constant 0 : index
    %121 = vector.load %arg11[%c0_50, %c0_51] : memref<32x64xf32, #tpu.memory_space<vmem>>, vector<32x64xf32>
    %cst_52 = arith.constant dense<0.000000e+00> : vector<16x64xf32>
    %122 = tpu.matmul %120, %121, %cst_52 {dimension_numbers = #tpu.dot_dimension_numbers<[1], [0], [0], [1], [0, 0, 1, 1], [], []>} : vector<16x32xf32>, vector<32x64xf32>, vector<16x64xf32> -> vector<16x64xf32>
    %c0_53 = arith.constant 0 : index
    %c0_54 = arith.constant 0 : index
    %123 = vector.load %arg12[%c0_53, %c0_54] : memref<1x64xf32, #tpu.memory_space<vmem>>, vector<1x64xf32>
    %124 = vector.broadcast %123 : vector<1x64xf32> to vector<16x64xf32>
    %125 = arith.addf %122, %124 : vector<16x64xf32>
    %cst_55 = arith.constant 0.000000e+00 : f32
    %126 = vector.broadcast %cst_55 : f32 to vector<16x64xf32>
    %127 = arith.maximumf %125, %126 : vector<16x64xf32>
    %c0_56 = arith.constant 0 : index
    %c0_57 = arith.constant 0 : index
    %128 = vector.load %arg13[%c0_56, %c0_57] : memref<64x32xf32, #tpu.memory_space<vmem>>, vector<64x32xf32>
    %cst_58 = arith.constant dense<0.000000e+00> : vector<16x32xf32>
    %129 = tpu.matmul %127, %128, %cst_58 {dimension_numbers = #tpu.dot_dimension_numbers<[1], [0], [0], [1], [0, 0, 1, 1], [], []>} : vector<16x64xf32>, vector<64x32xf32>, vector<16x32xf32> -> vector<16x32xf32>
    %c0_59 = arith.constant 0 : index
    %c0_60 = arith.constant 0 : index
    %130 = vector.load %arg14[%c0_59, %c0_60] : memref<1x32xf32, #tpu.memory_space<vmem>>, vector<1x32xf32>
    %131 = vector.broadcast %130 : vector<1x32xf32> to vector<16x32xf32>
    %132 = arith.addf %129, %131 : vector<16x32xf32>
    %133 = arith.addf %132, %120 : vector<16x32xf32>
    %c0_61 = arith.constant 0 : index
    %c0_62 = arith.constant 0 : index
    %134 = vector.load %arg15[%c0_61, %c0_62] : memref<1x32xf32, #tpu.memory_space<vmem>>, vector<1x32xf32>
    %c0_63 = arith.constant 0 : index
    %c0_64 = arith.constant 0 : index
    %135 = vector.load %arg16[%c0_63, %c0_64] : memref<1x32xf32, #tpu.memory_space<vmem>>, vector<1x32xf32>
    %cst_65 = arith.constant dense<0.000000e+00> : vector<16xf32>
    %136 = vector.multi_reduction <add>, %133, %cst_65 [1] : vector<16x32xf32> to vector<16xf32>
    %137 = vector.shape_cast %136 : vector<16xf32> to vector<16x1xf32>
    %cst_66 = arith.constant 3.200000e+01 : f32
    %138 = vector.broadcast %cst_66 : f32 to vector<16x1xf32>
    %139 = arith.divf %137, %138 : vector<16x1xf32>
    %140 = vector.broadcast %139 : vector<16x1xf32> to vector<16x32xf32>
    %141 = arith.subf %133, %140 : vector<16x32xf32>
    %142 = arith.mulf %141, %141 : vector<16x32xf32>
    %cst_67 = arith.constant dense<0.000000e+00> : vector<16xf32>
    %143 = vector.multi_reduction <add>, %142, %cst_67 [1] : vector<16x32xf32> to vector<16xf32>
    %144 = vector.shape_cast %143 : vector<16xf32> to vector<16x1xf32>
    %cst_68 = arith.constant 3.200000e+01 : f32
    %145 = vector.broadcast %cst_68 : f32 to vector<16x1xf32>
    %146 = arith.divf %144, %145 : vector<16x1xf32>
    %147 = vector.broadcast %139 : vector<16x1xf32> to vector<16x32xf32>
    %148 = arith.subf %133, %147 : vector<16x32xf32>
    %cst_69 = arith.constant 9.99999974E-6 : f32
    %149 = vector.broadcast %cst_69 : f32 to vector<16x1xf32>
    %150 = arith.addf %146, %149 : vector<16x1xf32>
    %151 = math.rsqrt %150 : vector<16x1xf32>
    %152 = vector.broadcast %151 : vector<16x1xf32> to vector<16x32xf32>
    %153 = arith.mulf %148, %152 : vector<16x32xf32>
    %154 = vector.broadcast %134 : vector<1x32xf32> to vector<16x32xf32>
    %155 = arith.mulf %153, %154 : vector<16x32xf32>
    %156 = vector.broadcast %135 : vector<1x32xf32> to vector<16x32xf32>
    %157 = arith.addf %155, %156 : vector<16x32xf32>
    %158 = vector.shape_cast %157 : vector<16x32xf32> to vector<2x8x32xf32>
    %c0_70 = arith.constant 0 : index
    %c0_71 = arith.constant 0 : index
    %c0_72 = arith.constant 0 : index
    %159 = vector.load %arg17[%c0_70, %c0_71, %c0_72] : memref<2x8x32xf32, #tpu.memory_space<vmem>>, vector<2x8x32xf32>
    tpu.vector_store %arg17[%c0_70, %c0_71, %c0_72], %158 {strides = array<i32>} : memref<2x8x32xf32, #tpu.memory_space<vmem>>, vector<2x8x32xf32>,
    return
  }
  func.func @transform_0(%arg0: i32) -> (i32, i32, i32) {
    %c0_i32 = arith.constant 0 : i32
    %c0_i32_0 = arith.constant 0 : i32
    %c0_i32_1 = arith.constant 0 : i32
    return %arg0, %c0_i32, %c0_i32_0 : i32, i32, i32
  }
  func.func @transform_1(%arg0: i32) -> (i32, i32, i32) {
    %c0_i32 = arith.constant 0 : i32
    %c0_i32_0 = arith.constant 0 : i32
    %c0_i32_1 = arith.constant 0 : i32
    return %arg0, %c0_i32, %c0_i32_0 : i32, i32, i32
  }
  func.func @transform_2(%arg0: i32) -> (i32, i32, i32) {
    %c0_i32 = arith.constant 0 : i32
    %c0_i32_0 = arith.constant 0 : i32
    %c0_i32_1 = arith.constant 0 : i32
    return %arg0, %c0_i32, %c0_i32_0 : i32, i32, i32
  }
  func.func @transform_3(%arg0: i32) -> (i32, i32) {
    %c0_i32 = arith.constant 0 : i32
    %c0_i32_0 = arith.constant 0 : i32
    %c0_i32_1 = arith.constant 0 : i32
    return %c0_i32, %c0_i32_0 : i32, i32
  }
  func.func @transform_4(%arg0: i32) -> (i32, i32) {
    %c0_i32 = arith.constant 0 : i32
    %c0_i32_0 = arith.constant 0 : i32
    %c0_i32_1 = arith.constant 0 : i32
    return %c0_i32, %c0_i32_0 : i32, i32
  }
  func.func @transform_5(%arg0: i32) -> (i32, i32) {
    %c0_i32 = arith.constant 0 : i32
    %c0_i32_0 = arith.constant 0 : i32
    %c0_i32_1 = arith.constant 0 : i32
    return %c0_i32, %c0_i32_0 : i32, i32
  }
  func.func @transform_6(%arg0: i32) -> (i32, i32) {
    %c0_i32 = arith.constant 0 : i32
    %c0_i32_0 = arith.constant 0 : i32
    %c0_i32_1 = arith.constant 0 : i32
    return %c0_i32, %c0_i32_0 : i32, i32
  }
  func.func @transform_7(%arg0: i32) -> (i32, i32) {
    %c0_i32 = arith.constant 0 : i32
    %c0_i32_0 = arith.constant 0 : i32
    %c0_i32_1 = arith.constant 0 : i32
    return %c0_i32, %c0_i32_0 : i32, i32
  }
  func.func @transform_8(%arg0: i32) -> (i32, i32) {
    %c0_i32 = arith.constant 0 : i32
    %c0_i32_0 = arith.constant 0 : i32
    %c0_i32_1 = arith.constant 0 : i32
    return %c0_i32, %c0_i32_0 : i32, i32
  }
  func.func @transform_9(%arg0: i32) -> (i32, i32) {
    %c0_i32 = arith.constant 0 : i32
    %c0_i32_0 = arith.constant 0 : i32
    %c0_i32_1 = arith.constant 0 : i32
    return %c0_i32, %c0_i32_0 : i32, i32
  }
  func.func @transform_10(%arg0: i32) -> (i32, i32) {
    %c0_i32 = arith.constant 0 : i32
    %c0_i32_0 = arith.constant 0 : i32
    %c0_i32_1 = arith.constant 0 : i32
    return %c0_i32, %c0_i32_0 : i32, i32
  }
  func.func @transform_11(%arg0: i32) -> (i32, i32) {
    %c0_i32 = arith.constant 0 : i32
    %c0_i32_0 = arith.constant 0 : i32
    %c0_i32_1 = arith.constant 0 : i32
    return %c0_i32, %c0_i32_0 : i32, i32
  }
  func.func @transform_12(%arg0: i32) -> (i32, i32) {
    %c0_i32 = arith.constant 0 : i32
    %c0_i32_0 = arith.constant 0 : i32
    %c0_i32_1 = arith.constant 0 : i32
    return %c0_i32, %c0_i32_0 : i32, i32
  }
  func.func @transform_13(%arg0: i32) -> (i32, i32) {
    %c0_i32 = arith.constant 0 : i32
    %c0_i32_0 = arith.constant 0 : i32
    %c0_i32_1 = arith.constant 0 : i32
    return %c0_i32, %c0_i32_0 : i32, i32
  }
  func.func @transform_14(%arg0: i32) -> (i32, i32) {
    %c0_i32 = arith.constant 0 : i32
    %c0_i32_0 = arith.constant 0 : i32
    %c0_i32_1 = arith.constant 0 : i32
    return %c0_i32, %c0_i32_0 : i32, i32
  }
  func.func @transform_15(%arg0: i32) -> (i32, i32) {
    %c0_i32 = arith.constant 0 : i32
    %c0_i32_0 = arith.constant 0 : i32
    %c0_i32_1 = arith.constant 0 : i32
    return %c0_i32, %c0_i32_0 : i32, i32
  }
  func.func @transform_16(%arg0: i32) -> (i32, i32, i32) {
    %c0_i32 = arith.constant 0 : i32
    %c0_i32_0 = arith.constant 0 : i32
    %c0_i32_1 = arith.constant 0 : i32
    return %arg0, %c0_i32, %c0_i32_0 : i32, i32, i32
  }
}

</mosaic_0001>

<llo_original>
// kernel: tpu_custom_call.1
$region0: #{tpu_custom_call.1}
  #allocation0 [shape = 'u32[]', space=smem, size = 0x4, offset = 0x4, fixed_abs, tag = 'smem constant byte address 0x4 - core index']
  #allocation1 [shape = 'u32[144,128]{1,0:T(1,128)}', space=vmem, size = 0x12000, scoped, tag = 'internal scratch']
  %s0 = inlined_call_operand.hbm [shape: f32[2,8,32], index: 0, kind: input, shape index: {}]
  %s1 = inlined_call_operand.hbm [shape: f32[2,8,32], index: 1, kind: input, shape index: {}]
  %s2 = inlined_call_operand.hbm [shape: f32[2,8,32], index: 2, kind: input, shape index: {}]
  %s3 = inlined_call_operand.vmem [shape: f32[32,32], index: 3, kind: input, shape index: {}]
  %s4 = inlined_call_operand.vmem [shape: f32[32,32], index: 4, kind: input, shape index: {}]
  %s5 = inlined_call_operand.vmem [shape: f32[32,32], index: 5, kind: input, shape index: {}]
  %s6 = inlined_call_operand.hbm [shape: f32[32,32], index: 6, kind: input, shape index: {}]
  %s7 = inlined_call_operand.vmem [shape: f32[1,32], index: 7, kind: input, shape index: {}]
  %s8 = inlined_call_operand.vmem [shape: f32[1,32], index: 8, kind: input, shape index: {}]
  %s9 = inlined_call_operand.vmem [shape: f32[1,32], index: 9, kind: input, shape index: {}]
  %s10 = inlined_call_operand.hbm [shape: f32[32,64], index: 10, kind: input, shape index: {}]
  %s11 = inlined_call_operand.vmem [shape: f32[1,64], index: 11, kind: input, shape index: {}]
  %s12 = inlined_call_operand.vmem [shape: f32[64,32], index: 12, kind: input, shape index: {}]
  %s13 = inlined_call_operand.vmem [shape: f32[1,32], index: 13, kind: input, shape index: {}]
  %s14 = inlined_call_operand.vmem [shape: f32[1,32], index: 14, kind: input, shape index: {}]
  %s15 = inlined_call_operand.vmem [shape: f32[1,32], index: 15, kind: input, shape index: {}]
  %s16 = inlined_call_operand.hbm [shape: f32[2,8,32], index: 16, kind: output, shape index: {}]
  %s17 = sld [smem:[#allocation0]]
  $region94: #{tpu_custom_call.1} parent=0
    _
  %s19 = ssub.s32 1, %s17
  %s20 = scalar_select 0, %s19, %s17
  $region1: #{tpu_custom_call.1} parent=0
    #allocation2 [shape = 'u8[8192]{0}', space=vmem, size = 0x2000, scoped, tag = 'input window, operand 0, single buffered']
    #allocation3 [shape = 's32[1]{0}', space=sflag, size = 0x4, scoped, tag = 'scoped memory for tpu_custom_call.1']
    #allocation4 [shape = 's32[1]{0}', space=sflag, size = 0x4, scoped, tag = 'scoped memory for tpu_custom_call.1']
    #allocation5 [shape = 'u8[8192]{0}', space=vmem, size = 0x2000, scoped, tag = 'input window, operand 1, single buffered']
    #allocation6 [shape = 's32[1]{0}', space=sflag, size = 0x4, scoped, tag = 'scoped memory for tpu_custom_call.1']
    #allocation7 [shape = 'u8[8192]{0}', space=vmem, size = 0x2000, scoped, tag = 'input window, operand 2, single buffered']
    #allocation8 [shape = 'u8[16384]{0}', space=vmem, size = 0x4000, scoped, tag = 'input window, operand 6, single buffered']
    #allocation9 [shape = 's32[1]{0}', space=sflag, size = 0x4, scoped, tag = 'scoped memory for tpu_custom_call.1']
    #allocation10 [shape = 'u8[16384]{0}', space=vmem, size = 0x4000, scoped, tag = 'input window, operand 10, single buffered']
    #allocation11 [shape = 'u8[8192]{0}', space=vmem, size = 0x2000, scoped, tag = 'output window, operand 0, single buffered']
    %21 = vsyncpa [#allocation3], 0
    %22 = vsyncpa [#allocation6], 0
    %23 = vsyncpa [#allocation9], 0
    %24 = vsyncpa [#allocation4], 0
    // Predicated region
    $region2: #{tpu_custom_call.1} parent=1 // pred_check
      _
    $region3: #{tpu_custom_call.1} parent=1 // pred_check_branch
      %26 = sbr.rel (0) target = $region5
    $region4: #{tpu_custom_call.1} parent=1 // pred_region
      %s28 = ssub.s32 256, 256
      %29 = vsyncadd [#allocation3], %s28
      %s30 = sshll.u32 [#allocation2], 4
      %s31 = int_to_ptr.vmem [resolvable:$true] %s30
      %36 = dma.hbm_to_vmem [thread:$0]  %s0, 256, %s31, [#allocation3], 128, 128, 8
    $region5: #{tpu_custom_call.1} parent=1 // pred_fallthru
      _
    // Predicated region
    $region6: #{tpu_custom_call.1} parent=1 // pred_check
      _
    $region7: #{tpu_custom_call.1} parent=1 // pred_check_branch
      %38 = sbr.rel (0) target = $region9
    $region8: #{tpu_custom_call.1} parent=1 // pred_region
      %s40 = ssub.s32 256, 256
      %41 = vsyncadd [#allocation6], %s40
      %s42 = sshll.u32 [#allocation5], 4
      %s43 = int_to_ptr.vmem [resolvable:$true] %s42
      %48 = dma.hbm_to_vmem [thread:$0]  %s1, 256, %s43, [#allocation6], 128, 128, 8
    $region9: #{tpu_custom_call.1} parent=1 // pred_fallthru
      _
    // Predicated region
    $region10: #{tpu_custom_call.1} parent=1 // pred_check
      _
    $region11: #{tpu_custom_call.1} parent=1 // pred_check_branch
      %50 = sbr.rel (0) target = $region13
    $region12: #{tpu_custom_call.1} parent=1 // pred_region
      %s52 = ssub.s32 256, 256
      %53 = vsyncadd [#allocation6], %s52
      %s54 = sshll.u32 [#allocation7], 4
      %s55 = int_to_ptr.vmem [resolvable:$true] %s54
      %60 = dma.hbm_to_vmem [thread:$0]  %s2, 256, %s55, [#allocation6], 128, 128, 8
    $region13: #{tpu_custom_call.1} parent=1 // pred_fallthru
      _
    // Predicated region
    $region14: #{tpu_custom_call.1} parent=1 // pred_check
      _
    $region15: #{tpu_custom_call.1} parent=1 // pred_check_branch
      %62 = sbr.rel (0) target = $region17
    $region16: #{tpu_custom_call.1} parent=1 // pred_region
      _
    $region17: #{tpu_custom_call.1} parent=1 // pred_fallthru
      _
    // Predicated region
    $region18: #{tpu_custom_call.1} parent=1 // pred_check
      _
    $region19: #{tpu_custom_call.1} parent=1 // pred_check_branch
      %64 = sbr.rel (0) target = $region21
    $region20: #{tpu_custom_call.1} parent=1 // pred_region
      _
    $region21: #{tpu_custom_call.1} parent=1 // pred_fallthru
      _
    // Predicated region
    $region22: #{tpu_custom_call.1} parent=1 // pred_check
      _
    $region23: #{tpu_custom_call.1} parent=1 // pred_check_branch
      %66 = sbr.rel (0) target = $region25
    $region24: #{tpu_custom_call.1} parent=1 // pred_region
      _
    $region25: #{tpu_custom_call.1} parent=1 // pred_fallthru
      _
    // Predicated region
    $region26: #{tpu_custom_call.1} parent=1 // pred_check
      _
    $region27: #{tpu_custom_call.1} parent=1 // pred_check_branch
      %68 = sbr.rel (0) target = $region29
    $region28: #{tpu_custom_call.1} parent=1 // pred_region
      %s70 = ssub.s32 512, 512
      %71 = vsyncadd [#allocation9], %s70
      %s72 = sshll.u32 [#allocation8], 4
      %s73 = int_to_ptr.vmem [resolvable:$true] %s72
      %78 = dma.hbm_to_vmem [thread:$0]  %s6, 512, %s73, [#allocation9], 128, 128, 8
    $region29: #{tpu_custom_call.1} parent=1 // pred_fallthru
      _
    // Predicated region
    $region30: #{tpu_custom_call.1} parent=1 // pred_check
      _
    $region31: #{tpu_custom_call.1} parent=1 // pred_check_branch
      %80 = sbr.rel (0) target = $region33
    $region32: #{tpu_custom_call.1} parent=1 // pred_region
      _
    $region33: #{tpu_custom_call.1} parent=1 // pred_fallthru
      _
    // Predicated region
    $region34: #{tpu_custom_call.1} parent=1 // pred_check
      _
    $region35: #{tpu_custom_call.1} parent=1 // pred_check_branch
      %82 = sbr.rel (0) target = $region37
    $region36: #{tpu_custom_call.1} parent=1 // pred_region
      _
    $region37: #{tpu_custom_call.1} parent=1 // pred_fallthru
      _
    // Predicated region
    $region38: #{tpu_custom_call.1} parent=1 // pred_check
      _
    $region39: #{tpu_custom_call.1} parent=1 // pred_check_branch
      %84 = sbr.rel (0) target = $region41
    $region40: #{tpu_custom_call.1} parent=1 // pred_region
      _
    $region41: #{tpu_custom_call.1} parent=1 // pred_fallthru
      _
    // Predicated region
    $region42: #{tpu_custom_call.1} parent=1 // pred_check
      _
    $region43: #{tpu_custom_call.1} parent=1 // pred_check_branch
      %86 = sbr.rel (0) target = $region45
    $region44: #{tpu_custom_call.1} parent=1 // pred_region
      %s88 = ssub.s32 512, 512
      %89 = vsyncadd [#allocation9], %s88
      %s90 = sshll.u32 [#allocation10], 4
      %s91 = int_to_ptr.vmem [resolvable:$true] %s90
      %96 = dma.hbm_to_vmem [thread:$0]  %s10, 512, %s91, [#allocation9], 128, 128, 8
    $region45: #{tpu_custom_call.1} parent=1 // pred_fallthru
      _
    // Predicated region
    $region46: #{tpu_custom_call.1} parent=1 // pred_check
      _
    $region47: #{tpu_custom_call.1} parent=1 // pred_check_branch
      %98 = sbr.rel (0) target = $region49
    $region48: #{tpu_custom_call.1} parent=1 // pred_region
      _
    $region49: #{tpu_custom_call.1} parent=1 // pred_fallthru
      _
    // Predicated region
    $region50: #{tpu_custom_call.1} parent=1 // pred_check
      _
    $region51: #{tpu_custom_call.1} parent=1 // pred_check_branch
      %100 = sbr.rel (0) target = $region53
    $region52: #{tpu_custom_call.1} parent=1 // pred_region
      _
    $region53: #{tpu_custom_call.1} parent=1 // pred_fallthru
      _
    // Predicated region
    $region54: #{tpu_custom_call.1} parent=1 // pred_check
      _
    $region55: #{tpu_custom_call.1} parent=1 // pred_check_branch
      %102 = sbr.rel (0) target = $region57
    $region56: #{tpu_custom_call.1} parent=1 // pred_region
      _
    $region57: #{tpu_custom_call.1} parent=1 // pred_fallthru
      _
    // Predicated region
    $region58: #{tpu_custom_call.1} parent=1 // pred_check
      _
    $region59: #{tpu_custom_call.1} parent=1 // pred_check_branch
      %104 = sbr.rel (0) target = $region61
    $region60: #{tpu_custom_call.1} parent=1 // pred_region
      _
    $region61: #{tpu_custom_call.1} parent=1 // pred_fallthru
      _
    // Predicated region
    $region62: #{tpu_custom_call.1} parent=1 // pred_check
      _
    $region63: #{tpu_custom_call.1} parent=1 // pred_check_branch
      %106 = sbr.rel (0) target = $region65
    $region64: #{tpu_custom_call.1} parent=1 // pred_region
      _
    $region65: #{tpu_custom_call.1} parent=1 // pred_fallthru
      _
    // Predicated region
    $region66: #{tpu_custom_call.1} parent=1 // pred_check
      _
    $region67: #{tpu_custom_call.1} parent=1 // pred_check_branch
      %108 = sbr.rel (0) target = $region69
    $region68: #{tpu_custom_call.1} parent=1 // pred_region
      %109 = dma.done [#allocation3], 256
    $region69: #{tpu_custom_call.1} parent=1 // pred_fallthru
      _
    // Predicated region
    $region70: #{tpu_custom_call.1} parent=1 // pred_check
      _
    $region71: #{tpu_custom_call.1} parent=1 // pred_check_branch
      %111 = sbr.rel (0) target = $region73
    $region72: #{tpu_custom_call.1} parent=1 // pred_region
      %112 = dma.done [#allocation6], 256
    $region73: #{tpu_custom_call.1} parent=1 // pred_fallthru
      _
    // Predicated region
    $region74: #{tpu_custom_call.1} parent=1 // pred_check
      _
    $region75: #{tpu_custom_call.1} parent=1 // pred_check_branch
      %114 = sbr.rel (0) target = $region77
    $region76: #{tpu_custom_call.1} parent=1 // pred_region
      %115 = dma.done [#allocation6], 256
    $region77: #{tpu_custom_call.1} parent=1 // pred_fallthru
      _
    // Predicated region
    $region78: #{tpu_custom_call.1} parent=1 // pred_check
      _
    $region79: #{tpu_custom_call.1} parent=1 // pred_check_branch
      %117 = sbr.rel (0) target = $region81
    $region80: #{tpu_custom_call.1} parent=1 // pred_region
      %118 = dma.done [#allocation9], 512
    $region81: #{tpu_custom_call.1} parent=1 // pred_fallthru
      _
    // Predicated region
    $region82: #{tpu_custom_call.1} parent=1 // pred_check
      _
    $region83: #{tpu_custom_call.1} parent=1 // pred_check_branch
      %120 = sbr.rel (0) target = $region85
    $region84: #{tpu_custom_call.1} parent=1 // pred_region
      %121 = dma.done [#allocation9], 512
    $region85: #{tpu_custom_call.1} parent=1 // pred_fallthru
      _
    %v122 = vld [vmem:[#allocation5] sm:$0xff]
    %v123 = vld [vmem:[#allocation5 + $0x8] sm:$0xff]
    %v124 = vld [vmem:[#allocation2] sm:$0xff]
    %v125 = vld [vmem:[#allocation2 + $0x8] sm:$0xff]
    %v126 = vld [vmem:[#allocation7] sm:$0xff]
    %v127 = vld [vmem:[#allocation7 + $0x8] sm:$0xff]
    %v128 = vld [vmem:[%s3] sm:$0xff]
    %v129 = vld [vmem:[%s3 + $0x8] sm:$0xff]
    %v130 = vld [vmem:[%s3 + $0x10] sm:$0xff]
    %v131 = vld [vmem:[%s3 + $0x18] sm:$0xff]
    %vm132 = vcmask 261120
    %v134 = vsel %vm132, %v122, 0
    %v137 = vsel %vm132, %v123, 0
    %139 = vmatprep.subr.mxu0 0.0
    %140 = vmatpush1.msra.mxu0 %v128
    %141 = vmatprep.subr.mxu0 0.0
    %142 = vmatpush1.msra.mxu0 %v129
    %143 = vmatprep.subr.mxu0 0.0
    %144 = vmatpush1.msra.mxu0 %v130
    %145 = vmatprep.subr.mxu0 0.0
    %146 = vmatpush1.msra.mxu0 %v131
    %147 = vmatprep.subr.mxu0 0.0
    %148 = vmatpush1.msra.mxu0 0.0
    %149 = vmatprep.subr.mxu0 0.0
    %150 = vmatpush1.msra.mxu0 0.0
    %151 = vmatprep.subr.mxu0 0.0
    %152 = vmatpush1.msra.mxu0 0.0
    %153 = vmatprep.subr.mxu0 0.0
    %154 = vmatpush1.msra.mxu0 0.0
    %155 = vmatprep.subr.mxu0 0.0
    %156 = vmatpush1.msra.mxu0 0.0
    %157 = vmatprep.subr.mxu0 0.0
    %158 = vmatpush1.msra.mxu0 0.0
    %159 = vmatprep.subr.mxu0 0.0
    %160 = vmatpush1.msra.mxu0 0.0
    %161 = vmatprep.subr.mxu0 0.0
    %162 = vmatpush1.msra.mxu0 0.0
    %163 = vmatprep.subr.mxu0 0.0
    %164 = vmatpush1.msra.mxu0 0.0
    %165 = vmatprep.subr.mxu0 0.0
    %166 = vmatpush1.msra.mxu0 0.0
    %167 = vmatprep.subr.mxu0 0.0
    %168 = vmatpush1.msra.mxu0 0.0
    %169 = vmatprep.subr.mxu0 0.0
    %170 = vmatpush1.msra.mxu0 0.0
    %171 = vmatprep.subr.mxu0 0.0
    %172 = vmatpush1.msra.mxu0 0.0
    %173 = vmatprep.subr.mxu0 0.0
    %174 = vmatpush1.msra.mxu0 0.0
    %175 = vmatprep.subr.mxu0 0.0
    %176 = vmatpush1.msra.mxu0 0.0
    %177 = vmatprep.subr.mxu0 0.0
    %178 = vmatpush1.msra.mxu0 0.0
    %179 = vmatprep.subr.mxu0 0.0
    %180 = vmatpush1.msra.mxu0 0.0
    %181 = vmatprep.subr.mxu0 0.0
    %182 = vmatpush1.msra.mxu0 0.0
    %183 = vmatprep.subr.mxu0 0.0
    %184 = vmatpush1.msra.mxu0 0.0
    %185 = vmatprep.subr.mxu0 0.0
    %186 = vmatpush1.msra.mxu0 0.0
    %187 = vmatprep.subr.mxu0 0.0
    %188 = vmatpush1.msra.mxu0 0.0
    %189 = vmatprep.subr.mxu0 0.0
    %190 = vmatpush1.msra.mxu0 0.0
    %191 = vmatprep.subr.mxu0 0.0
    %192 = vmatpush1.msra.mxu0 0.0
    %193 = vmatprep.subr.mxu0 0.0
    %194 = vmatpush1.msra.mxu0 0.0
    %195 = vmatprep.subr.mxu0 0.0
    %196 = vmatpush1.msra.mxu0 0.0
    %197 = vmatprep.subr.mxu0 0.0
    %198 = vmatpush1.msra.mxu0 0.0
    %199 = vmatprep.subr.mxu0 0.0
    %200 = vmatpush1.msra.mxu0 0.0
    %201 = vmatprep.subr.mxu0 0.0
    %202 = vmatpush1.msra.mxu0 0.0
    %203 = vmatprep.mubr.f32.mxu0 0.0
    %204 = vmatmul.mubr.f32.gmra.mrb[0].mxu0 %v134
    %v205 = vpop.f32.mrb[0].mxu0
    %v206 = vadd.f32 0.0, %v205
    %v207 = vpop.f32.mrb[0].mxu0
    %208 = vmatprep.mubr.f32.mxu0 0.0
    %209 = vmatmul.mubr.f32.gmra.mrb[0].mxu0 %v137
    %v210 = vpop.f32.mrb[0].mxu0
    %v211 = vadd.f32 0.0, %v210
    %v212 = vpop.f32.mrb[0].mxu0
    %213 = vdwg.mxu0
    %v214 = vld [vmem:[%s4] sm:$0xff]
    %v215 = vld [vmem:[%s4 + $0x8] sm:$0xff]
    %v216 = vld [vmem:[%s4 + $0x10] sm:$0xff]
    %v217 = vld [vmem:[%s4 + $0x18] sm:$0xff]
    %v219 = vsel %vm132, %v124, 0
    %v222 = vsel %vm132, %v125, 0
    %224 = vmatprep.subr.mxu0 0.0
    %225 = vmatpush1.msra.mxu0 %v214
    %226 = vmatprep.subr.mxu0 0.0
    %227 = vmatpush1.msra.mxu0 %v215
    %228 = vmatprep.subr.mxu0 0.0
    %229 = vmatpush1.msra.mxu0 %v216
    %230 = vmatprep.subr.mxu0 0.0
    %231 = vmatpush1.msra.mxu0 %v217
    %232 = vmatprep.subr.mxu0 0.0
    %233 = vmatpush1.msra.mxu0 0.0
    %234 = vmatprep.subr.mxu0 0.0
    %235 = vmatpush1.msra.mxu0 0.0
    %236 = vmatprep.subr.mxu0 0.0
    %237 = vmatpush1.msra.mxu0 0.0
    %238 = vmatprep.subr.mxu0 0.0
    %239 = vmatpush1.msra.mxu0 0.0
    %240 = vmatprep.subr.mxu0 0.0
    %241 = vmatpush1.msra.mxu0 0.0
    %242 = vmatprep.subr.mxu0 0.0
    %243 = vmatpush1.msra.mxu0 0.0
    %244 = vmatprep.subr.mxu0 0.0
    %245 = vmatpush1.msra.mxu0 0.0
    %246 = vmatprep.subr.mxu0 0.0
    %247 = vmatpush1.msra.mxu0 0.0
    %248 = vmatprep.subr.mxu0 0.0
    %249 = vmatpush1.msra.mxu0 0.0
    %250 = vmatprep.subr.mxu0 0.0
    %251 = vmatpush1.msra.mxu0 0.0
    %252 = vmatprep.subr.mxu0 0.0
    %253 = vmatpush1.msra.mxu0 0.0
    %254 = vmatprep.subr.mxu0 0.0
    %255 = vmatpush1.msra.mxu0 0.0
    %256 = vmatprep.subr.mxu0 0.0
    %257 = vmatpush1.msra.mxu0 0.0
    %258 = vmatprep.subr.mxu0 0.0
    %259 = vmatpush1.msra.mxu0 0.0
    %260 = vmatprep.subr.mxu0 0.0
    %261 = vmatpush1.msra.mxu0 0.0
    %262 = vmatprep.subr.mxu0 0.0
    %263 = vmatpush1.msra.mxu0 0.0
    %264 = vmatprep.subr.mxu0 0.0
    %265 = vmatpush1.msra.mxu0 0.0
    %266 = vmatprep.subr.mxu0 0.0
    %267 = vmatpush1.msra.mxu0 0.0
    %268 = vmatprep.subr.mxu0 0.0
    %269 = vmatpush1.msra.mxu0 0.0
    %270 = vmatprep.subr.mxu0 0.0
    %271 = vmatpush1.msra.mxu0 0.0
    %272 = vmatprep.subr.mxu0 0.0
    %273 = vmatpush1.msra.mxu0 0.0
    %274 = vmatprep.subr.mxu0 0.0
    %275 = vmatpush1.msra.mxu0 0.0
    %276 = vmatprep.subr.mxu0 0.0
    %277 = vmatpush1.msra.mxu0 0.0
    %278 = vmatprep.subr.mxu0 0.0
    %279 = vmatpush1.msra.mxu0 0.0
    %280 = vmatprep.subr.mxu0 0.0
    %281 = vmatpush1.msra.mxu0 0.0
    %282 = vmatprep.subr.mxu0 0.0
    %283 = vmatpush1.msra.mxu0 0.0
    %284 = vmatprep.subr.mxu0 0.0
    %285 = vmatpush1.msra.mxu0 0.0
    %286 = vmatprep.subr.mxu0 0.0
    %287 = vmatpush1.msra.mxu0 0.0
    %288 = vmatprep.mubr.f32.mxu0 0.0
    %289 = vmatmul.mubr.f32.gmra.mrb[0].mxu0 %v219
    %v290 = vpop.f32.mrb[0].mxu0
    %v291 = vadd.f32 0.0, %v290
    %v292 = vpop.f32.mrb[0].mxu0
    %293 = vmatprep.mubr.f32.mxu0 0.0
    %294 = vmatmul.mubr.f32.gmra.mrb[0].mxu0 %v222
    %v295 = vpop.f32.mrb[0].mxu0
    %v296 = vadd.f32 0.0, %v295
    %v297 = vpop.f32.mrb[0].mxu0
    %298 = vdwg.mxu0
    %v299 = vld [vmem:[%s5] sm:$0xff]
    %v300 = vld [vmem:[%s5 + $0x8] sm:$0xff]
    %v301 = vld [vmem:[%s5 + $0x10] sm:$0xff]
    %v302 = vld [vmem:[%s5 + $0x18] sm:$0xff]
    %v304 = vsel %vm132, %v126, 0
    %v307 = vsel %vm132, %v127, 0
    %309 = vmatprep.subr.mxu0 0.0
    %310 = vmatpush1.msra.mxu0 %v299
    %311 = vmatprep.subr.mxu0 0.0
    %312 = vmatpush1.msra.mxu0 %v300
    %313 = vmatprep.subr.mxu0 0.0
    %314 = vmatpush1.msra.mxu0 %v301
    %315 = vmatprep.subr.mxu0 0.0
    %316 = vmatpush1.msra.mxu0 %v302
    %317 = vmatprep.subr.mxu0 0.0
    %318 = vmatpush1.msra.mxu0 0.0
    %319 = vmatprep.subr.mxu0 0.0
    %320 = vmatpush1.msra.mxu0 0.0
    %321 = vmatprep.subr.mxu0 0.0
    %322 = vmatpush1.msra.mxu0 0.0
    %323 = vmatprep.subr.mxu0 0.0
    %324 = vmatpush1.msra.mxu0 0.0
    %325 = vmatprep.subr.mxu0 0.0
    %326 = vmatpush1.msra.mxu0 0.0
    %327 = vmatprep.subr.mxu0 0.0
    %328 = vmatpush1.msra.mxu0 0.0
    %329 = vmatprep.subr.mxu0 0.0
    %330 = vmatpush1.msra.mxu0 0.0
    %331 = vmatprep.subr.mxu0 0.0
    %332 = vmatpush1.msra.mxu0 0.0
    %333 = vmatprep.subr.mxu0 0.0
    %334 = vmatpush1.msra.mxu0 0.0
    %335 = vmatprep.subr.mxu0 0.0
    %336 = vmatpush1.msra.mxu0 0.0
    %337 = vmatprep.subr.mxu0 0.0
    %338 = vmatpush1.msra.mxu0 0.0
    %339 = vmatprep.subr.mxu0 0.0
    %340 = vmatpush1.msra.mxu0 0.0
    %341 = vmatprep.subr.mxu0 0.0
    %342 = vmatpush1.msra.mxu0 0.0
    %343 = vmatprep.subr.mxu0 0.0
    %344 = vmatpush1.msra.mxu0 0.0
    %345 = vmatprep.subr.mxu0 0.0
    %346 = vmatpush1.msra.mxu0 0.0
    %347 = vmatprep.subr.mxu0 0.0
    %348 = vmatpush1.msra.mxu0 0.0
    %349 = vmatprep.subr.mxu0 0.0
    %350 = vmatpush1.msra.mxu0 0.0
    %351 = vmatprep.subr.mxu0 0.0
    %352 = vmatpush1.msra.mxu0 0.0
    %353 = vmatprep.subr.mxu0 0.0
    %354 = vmatpush1.msra.mxu0 0.0
    %355 = vmatprep.subr.mxu0 0.0
    %356 = vmatpush1.msra.mxu0 0.0
    %357 = vmatprep.subr.mxu0 0.0
    %358 = vmatpush1.msra.mxu0 0.0
    %359 = vmatprep.subr.mxu0 0.0
    %360 = vmatpush1.msra.mxu0 0.0
    %361 = vmatprep.subr.mxu0 0.0
    %362 = vmatpush1.msra.mxu0 0.0
    %363 = vmatprep.subr.mxu0 0.0
    %364 = vmatpush1.msra.mxu0 0.0
    %365 = vmatprep.subr.mxu0 0.0
    %366 = vmatpush1.msra.mxu0 0.0
    %367 = vmatprep.subr.mxu0 0.0
    %368 = vmatpush1.msra.mxu0 0.0
    %369 = vmatprep.subr.mxu0 0.0
    %370 = vmatpush1.msra.mxu0 0.0
    %371 = vmatprep.subr.mxu0 0.0
    %372 = vmatpush1.msra.mxu0 0.0
    %373 = vmatprep.mubr.f32.mxu0 0.0
    %374 = vmatmul.mubr.f32.gmra.mrb[0].mxu0 %v304
    %v375 = vpop.f32.mrb[0].mxu0
    %v376 = vadd.f32 0.0, %v375
    %v377 = vpop.f32.mrb[0].mxu0
    %378 = vmatprep.mubr.f32.mxu0 0.0
    %379 = vmatmul.mubr.f32.gmra.mrb[0].mxu0 %v307
    %v380 = vpop.f32.mrb[0].mxu0
    %v381 = vadd.f32 0.0, %v380
    %v382 = vpop.f32.mrb[0].mxu0
    %383 = vdwg.mxu0
    %v384 = vld [vmem:[#allocation8] sm:$0xff]
    %v385 = vld [vmem:[#allocation8 + $0x8] sm:$0xff]
    %v386 = vld [vmem:[#allocation8 + $0x10] sm:$0xff]
    %v387 = vld [vmem:[#allocation8 + $0x18] sm:$0xff]
    %vm388 = vcmask 64512
    %v390 = vsel %vm388, %v206, 0
    %v393 = vsel %vm388, %v291, 0
    %395 = vmatprep.subr.mxu0 0.0
    %396 = vmatpush1.xpose.msra.mxu0 %v393
    %397 = vmatprep.subr.mxu0 0.0
    %398 = vmatpush1.xpose.msra.mxu0 0.0
    %399 = vmatprep.subr.mxu0 0.0
    %400 = vmatpush1.xpose.msra.mxu0 0.0
    %401 = vmatprep.subr.mxu0 0.0
    %402 = vmatpush1.xpose.msra.mxu0 0.0
    %403 = vmatprep.subr.mxu0 0.0
    %404 = vmatpush1.xpose.msra.mxu0 0.0
    %405 = vmatprep.subr.mxu0 0.0
    %406 = vmatpush1.xpose.msra.mxu0 0.0
    %407 = vmatprep.subr.mxu0 0.0
    %408 = vmatpush1.xpose.msra.mxu0 0.0
    %409 = vmatprep.subr.mxu0 0.0
    %410 = vmatpush1.xpose.msra.mxu0 0.0
    %411 = vmatprep.subr.mxu0 0.0
    %412 = vmatpush1.xpose.msra.mxu0 0.0
    %413 = vmatprep.subr.mxu0 0.0
    %414 = vmatpush1.xpose.msra.mxu0 0.0
    %415 = vmatprep.subr.mxu0 0.0
    %416 = vmatpush1.xpose.msra.mxu0 0.0
    %417 = vmatprep.subr.mxu0 0.0
    %418 = vmatpush1.xpose.msra.mxu0 0.0
    %419 = vmatprep.subr.mxu0 0.0
    %420 = vmatpush1.xpose.msra.mxu0 0.0
    %421 = vmatprep.subr.mxu0 0.0
    %422 = vmatpush1.xpose.msra.mxu0 0.0
    %423 = vmatprep.subr.mxu0 0.0
    %424 = vmatpush1.xpose.msra.mxu0 0.0
    %425 = vmatprep.subr.mxu0 0.0
    %426 = vmatpush1.xpose.msra.mxu0 0.0
    %427 = vmatprep.subr.mxu0 0.0
    %428 = vmatpush1.xpose.msra.mxu0 0.0
    %429 = vmatprep.subr.mxu0 0.0
    %430 = vmatpush1.xpose.msra.mxu0 0.0
    %431 = vmatprep.subr.mxu0 0.0
    %432 = vmatpush1.xpose.msra.mxu0 0.0
    %433 = vmatprep.subr.mxu0 0.0
    %434 = vmatpush1.xpose.msra.mxu0 0.0
    %435 = vmatprep.subr.mxu0 0.0
    %436 = vmatpush1.xpose.msra.mxu0 0.0
    %437 = vmatprep.subr.mxu0 0.0
    %438 = vmatpush1.xpose.msra.mxu0 0.0
    %439 = vmatprep.subr.mxu0 0.0
    %440 = vmatpush1.xpose.msra.mxu0 0.0
    %441 = vmatprep.subr.mxu0 0.0
    %442 = vmatpush1.xpose.msra.mxu0 0.0
    %443 = vmatprep.subr.mxu0 0.0
    %444 = vmatpush1.xpose.msra.mxu0 0.0
    %445 = vmatprep.subr.mxu0 0.0
    %446 = vmatpush1.xpose.msra.mxu0 0.0
    %447 = vmatprep.subr.mxu0 0.0
    %448 = vmatpush1.xpose.msra.mxu0 0.0
    %449 = vmatprep.subr.mxu0 0.0
    %450 = vmatpush1.xpose.msra.mxu0 0.0
    %451 = vmatprep.subr.mxu0 0.0
    %452 = vmatpush1.xpose.msra.mxu0 0.0
    %453 = vmatprep.subr.mxu0 0.0
    %454 = vmatpush1.xpose.msra.mxu0 0.0
    %455 = vmatprep.subr.mxu0 0.0
    %456 = vmatpush1.xpose.msra.mxu0 0.0
    %457 = vmatprep.subr.mxu0 0.0
    %458 = vmatpush1.xpose.msra.mxu0 0.0
    %459 = vmatprep.mubr.f32.mxu0 0.0
    %460 = vmatmul.mubr.f32.gmra.mrb[0].mxu0 %v390
    %v461 = vpop.f32.mrb[0].mxu0
    %v462 = vadd.f32 0.0, %v461
    %v463 = vpop.f32.mrb[0].mxu0
    %464 = vdwg.mxu0
    %v466 = vsel %vm388, %v211, 0
    %v469 = vsel %vm388, %v296, 0
    %471 = vmatprep.subr.mxu0 0.0
    %472 = vmatpush1.xpose.msra.mxu0 %v469
    %473 = vmatprep.subr.mxu0 0.0
    %474 = vmatpush1.xpose.msra.mxu0 0.0
    %475 = vmatprep.subr.mxu0 0.0
    %476 = vmatpush1.xpose.msra.mxu0 0.0
    %477 = vmatprep.subr.mxu0 0.0
    %478 = vmatpush1.xpose.msra.mxu0 0.0
    %479 = vmatprep.subr.mxu0 0.0
    %480 = vmatpush1.xpose.msra.mxu0 0.0
    %481 = vmatprep.subr.mxu0 0.0
    %482 = vmatpush1.xpose.msra.mxu0 0.0
    %483 = vmatprep.subr.mxu0 0.0
    %484 = vmatpush1.xpose.msra.mxu0 0.0
    %485 = vmatprep.subr.mxu0 0.0
    %486 = vmatpush1.xpose.msra.mxu0 0.0
    %487 = vmatprep.subr.mxu0 0.0
    %488 = vmatpush1.xpose.msra.mxu0 0.0
    %489 = vmatprep.subr.mxu0 0.0
    %490 = vmatpush1.xpose.msra.mxu0 0.0
    %491 = vmatprep.subr.mxu0 0.0
    %492 = vmatpush1.xpose.msra.mxu0 0.0
    %493 = vmatprep.subr.mxu0 0.0
    %494 = vmatpush1.xpose.msra.mxu0 0.0
    %495 = vmatprep.subr.mxu0 0.0
    %496 = vmatpush1.xpose.msra.mxu0 0.0
    %497 = vmatprep.subr.mxu0 0.0
    %498 = vmatpush1.xpose.msra.mxu0 0.0
    %499 = vmatprep.subr.mxu0 0.0
    %500 = vmatpush1.xpose.msra.mxu0 0.0
    %501 = vmatprep.subr.mxu0 0.0
    %502 = vmatpush1.xpose.msra.mxu0 0.0
    %503 = vmatprep.subr.mxu0 0.0
    %504 = vmatpush1.xpose.msra.mxu0 0.0
    %505 = vmatprep.subr.mxu0 0.0
    %506 = vmatpush1.xpose.msra.mxu0 0.0
    %507 = vmatprep.subr.mxu0 0.0
    %508 = vmatpush1.xpose.msra.mxu0 0.0
    %509 = vmatprep.subr.mxu0 0.0
    %510 = vmatpush1.xpose.msra.mxu0 0.0
    %511 = vmatprep.subr.mxu0 0.0
    %512 = vmatpush1.xpose.msra.mxu0 0.0
    %513 = vmatprep.subr.mxu0 0.0
    %514 = vmatpush1.xpose.msra.mxu0 0.0
    %515 = vmatprep.subr.mxu0 0.0
    %516 = vmatpush1.xpose.msra.mxu0 0.0
    %517 = vmatprep.subr.mxu0 0.0
    %518 = vmatpush1.xpose.msra.mxu0 0.0
    %519 = vmatprep.subr.mxu0 0.0
    %520 = vmatpush1.xpose.msra.mxu0 0.0
    %521 = vmatprep.subr.mxu0 0.0
    %522 = vmatpush1.xpose.msra.mxu0 0.0
    %523 = vmatprep.subr.mxu0 0.0
    %524 = vmatpush1.xpose.msra.mxu0 0.0
    %525 = vmatprep.subr.mxu0 0.0
    %526 = vmatpush1.xpose.msra.mxu0 0.0
    %527 = vmatprep.subr.mxu0 0.0
    %528 = vmatpush1.xpose.msra.mxu0 0.0
    %529 = vmatprep.subr.mxu0 0.0
    %530 = vmatpush1.xpose.msra.mxu0 0.0
    %531 = vmatprep.subr.mxu0 0.0
    %532 = vmatpush1.xpose.msra.mxu0 0.0
    %533 = vmatprep.subr.mxu0 0.0
    %534 = vmatpush1.xpose.msra.mxu0 0.0
    %535 = vmatprep.mubr.f32.mxu0 0.0
    %536 = vmatmul.mubr.f32.gmra.mrb[0].mxu0 %v466
    %v537 = vpop.f32.mrb[0].mxu0
    %v538 = vadd.f32 0.0, %v537
    %v539 = vpop.f32.mrb[0].mxu0
    %540 = vdwg.mxu0
    %v541 = vsel %vm388, %v462, -inf
    %542 = vmax.xlane.f32.xlu0 %v541
    %v543 = vpop.xlane.xlu0 %542
    %v544 = vsel %vm388, %v538, -inf
    %545 = vmax.xlane.f32.xlu0 %v544
    %v546 = vpop.xlane.xlu0 %545
    %v547 = vsub.f32 %v462, %v543
    %v548 = vsub.f32 %v538, %v546
    %v549 = vmul.f32 %v547, 1.442695
    %v550 = vpow.pop %v549
    %v551 = vmul.f32 %v548, 1.442695
    %v552 = vpow.pop %v551
    %v553 = vsel %vm388, %v550, 0.0
    %554 = vadd.xlane.f32.xlu0 %v553
    %v555 = vpop.xlane.xlu0 %554
    %v556 = vsel %vm388, %v552, 0.0
    %557 = vadd.xlane.f32.xlu0 %v556
    %v558 = vpop.xlane.xlu0 %557
    %v559 = vrcp.pop %v555
    %v560 = vrcp.pop %v558
    %v561 = vmul.f32 %v550, %v559
    %v562 = vmul.f32 %v552, %v560
    %v564 = vsel %vm388, %v561, 0
    %566 = vmatprep.subr.mxu0 0.0
    %567 = vmatpush1.msra.mxu0 %v376
    %568 = vmatprep.subr.mxu0 0.0
    %569 = vmatpush1.msra.mxu0 0.0
    %570 = vmatprep.subr.mxu0 0.0
    %571 = vmatpush1.msra.mxu0 0.0
    %572 = vmatprep.subr.mxu0 0.0
    %573 = vmatpush1.msra.mxu0 0.0
    %574 = vmatprep.subr.mxu0 0.0
    %575 = vmatpush1.msra.mxu0 0.0
    %576 = vmatprep.subr.mxu0 0.0
    %577 = vmatpush1.msra.mxu0 0.0
    %578 = vmatprep.subr.mxu0 0.0
    %579 = vmatpush1.msra.mxu0 0.0
    %580 = vmatprep.subr.mxu0 0.0
    %581 = vmatpush1.msra.mxu0 0.0
    %582 = vmatprep.subr.mxu0 0.0
    %583 = vmatpush1.msra.mxu0 0.0
    %584 = vmatprep.subr.mxu0 0.0
    %585 = vmatpush1.msra.mxu0 0.0
    %586 = vmatprep.subr.mxu0 0.0
    %587 = vmatpush1.msra.mxu0 0.0
    %588 = vmatprep.subr.mxu0 0.0
    %589 = vmatpush1.msra.mxu0 0.0
    %590 = vmatprep.subr.mxu0 0.0
    %591 = vmatpush1.msra.mxu0 0.0
    %592 = vmatprep.subr.mxu0 0.0
    %593 = vmatpush1.msra.mxu0 0.0
    %594 = vmatprep.subr.mxu0 0.0
    %595 = vmatpush1.msra.mxu0 0.0
    %596 = vmatprep.subr.mxu0 0.0
    %597 = vmatpush1.msra.mxu0 0.0
    %598 = vmatprep.subr.mxu0 0.0
    %599 = vmatpush1.msra.mxu0 0.0
    %600 = vmatprep.subr.mxu0 0.0
    %601 = vmatpush1.msra.mxu0 0.0
    %602 = vmatprep.subr.mxu0 0.0
    %603 = vmatpush1.msra.mxu0 0.0
    %604 = vmatprep.subr.mxu0 0.0
    %605 = vmatpush1.msra.mxu0 0.0
    %606 = vmatprep.subr.mxu0 0.0
    %607 = vmatpush1.msra.mxu0 0.0
    %608 = vmatprep.subr.mxu0 0.0
    %609 = vmatpush1.msra.mxu0 0.0
    %610 = vmatprep.subr.mxu0 0.0
    %611 = vmatpush1.msra.mxu0 0.0
    %612 = vmatprep.subr.mxu0 0.0
    %613 = vmatpush1.msra.mxu0 0.0
    %614 = vmatprep.subr.mxu0 0.0
    %615 = vmatpush1.msra.mxu0 0.0
    %616 = vmatprep.subr.mxu0 0.0
    %617 = vmatpush1.msra.mxu0 0.0
    %618 = vmatprep.subr.mxu0 0.0
    %619 = vmatpush1.msra.mxu0 0.0
    %620 = vmatprep.subr.mxu0 0.0
    %621 = vmatpush1.msra.mxu0 0.0
    %622 = vmatprep.subr.mxu0 0.0
    %623 = vmatpush1.msra.mxu0 0.0
    %624 = vmatprep.subr.mxu0 0.0
    %625 = vmatpush1.msra.mxu0 0.0
    %626 = vmatprep.subr.mxu0 0.0
    %627 = vmatpush1.msra.mxu0 0.0
    %628 = vmatprep.subr.mxu0 0.0
    %629 = vmatpush1.msra.mxu0 0.0
    %630 = vmatprep.mubr.f32.mxu0 0.0
    %631 = vmatmul.mubr.f32.gmra.mrb[0].mxu0 %v564
    %v632 = vpop.f32.mrb[0].mxu0
    %v633 = vadd.f32 0.0, %v632
    %v634 = vpop.f32.mrb[0].mxu0
    %635 = vdwg.mxu0
    %v637 = vsel %vm388, %v562, 0
    %639 = vmatprep.subr.mxu0 0.0
    %640 = vmatpush1.msra.mxu0 %v381
    %641 = vmatprep.subr.mxu0 0.0
    %642 = vmatpush1.msra.mxu0 0.0
    %643 = vmatprep.subr.mxu0 0.0
    %644 = vmatpush1.msra.mxu0 0.0
    %645 = vmatprep.subr.mxu0 0.0
    %646 = vmatpush1.msra.mxu0 0.0
    %647 = vmatprep.subr.mxu0 0.0
    %648 = vmatpush1.msra.mxu0 0.0
    %649 = vmatprep.subr.mxu0 0.0
    %650 = vmatpush1.msra.mxu0 0.0
    %651 = vmatprep.subr.mxu0 0.0
    %652 = vmatpush1.msra.mxu0 0.0
    %653 = vmatprep.subr.mxu0 0.0
    %654 = vmatpush1.msra.mxu0 0.0
    %655 = vmatprep.subr.mxu0 0.0
    %656 = vmatpush1.msra.mxu0 0.0
    %657 = vmatprep.subr.mxu0 0.0
    %658 = vmatpush1.msra.mxu0 0.0
    %659 = vmatprep.subr.mxu0 0.0
    %660 = vmatpush1.msra.mxu0 0.0
    %661 = vmatprep.subr.mxu0 0.0
    %662 = vmatpush1.msra.mxu0 0.0
    %663 = vmatprep.subr.mxu0 0.0
    %664 = vmatpush1.msra.mxu0 0.0
    %665 = vmatprep.subr.mxu0 0.0
    %666 = vmatpush1.msra.mxu0 0.0
    %667 = vmatprep.subr.mxu0 0.0
    %668 = vmatpush1.msra.mxu0 0.0
    %669 = vmatprep.subr.mxu0 0.0
    %670 = vmatpush1.msra.mxu0 0.0
    %671 = vmatprep.subr.mxu0 0.0
    %672 = vmatpush1.msra.mxu0 0.0
    %673 = vmatprep.subr.mxu0 0.0
    %674 = vmatpush1.msra.mxu0 0.0
    %675 = vmatprep.subr.mxu0 0.0
    %676 = vmatpush1.msra.mxu0 0.0
    %677 = vmatprep.subr.mxu0 0.0
    %678 = vmatpush1.msra.mxu0 0.0
    %679 = vmatprep.subr.mxu0 0.0
    %680 = vmatpush1.msra.mxu0 0.0
    %681 = vmatprep.subr.mxu0 0.0
    %682 = vmatpush1.msra.mxu0 0.0
    %683 = vmatprep.subr.mxu0 0.0
    %684 = vmatpush1.msra.mxu0 0.0
    %685 = vmatprep.subr.mxu0 0.0
    %686 = vmatpush1.msra.mxu0 0.0
    %687 = vmatprep.subr.mxu0 0.0
    %688 = vmatpush1.msra.mxu0 0.0
    %689 = vmatprep.subr.mxu0 0.0
    %690 = vmatpush1.msra.mxu0 0.0
    %691 = vmatprep.subr.mxu0 0.0
    %692 = vmatpush1.msra.mxu0 0.0
    %693 = vmatprep.subr.mxu0 0.0
    %694 = vmatpush1.msra.mxu0 0.0
    %695 = vmatprep.subr.mxu0 0.0
    %696 = vmatpush1.msra.mxu0 0.0
    %697 = vmatprep.subr.mxu0 0.0
    %698 = vmatpush1.msra.mxu0 0.0
    %699 = vmatprep.subr.mxu0 0.0
    %700 = vmatpush1.msra.mxu0 0.0
    %701 = vmatprep.subr.mxu0 0.0
    %702 = vmatpush1.msra.mxu0 0.0
    %703 = vmatprep.mubr.f32.mxu0 0.0
    %704 = vmatmul.mubr.f32.gmra.mrb[0].mxu0 %v637
    %v705 = vpop.f32.mrb[0].mxu0
    %v706 = vadd.f32 0.0, %v705
    %v707 = vpop.f32.mrb[0].mxu0
    %708 = vdwg.mxu0
    %709 = vrot.lane.b32.xlu0 %v206, 120
    %v710 = vpop.permute.xlu0 %709
    %711 = vrot.lane.b32.xlu0 %v291, 120
    %v712 = vpop.permute.xlu0 %711
    %v713 = vsel %vm388, %v710, 0
    %v715 = vsel %vm388, %v712, 0
    %717 = vmatprep.subr.mxu0 0.0
    %718 = vmatpush1.xpose.msra.mxu0 %v715
    %719 = vmatprep.subr.mxu0 0.0
    %720 = vmatpush1.xpose.msra.mxu0 0.0
    %721 = vmatprep.subr.mxu0 0.0
    %722 = vmatpush1.xpose.msra.mxu0 0.0
    %723 = vmatprep.subr.mxu0 0.0
    %724 = vmatpush1.xpose.msra.mxu0 0.0
    %725 = vmatprep.subr.mxu0 0.0
    %726 = vmatpush1.xpose.msra.mxu0 0.0
    %727 = vmatprep.subr.mxu0 0.0
    %728 = vmatpush1.xpose.msra.mxu0 0.0
    %729 = vmatprep.subr.mxu0 0.0
    %730 = vmatpush1.xpose.msra.mxu0 0.0
    %731 = vmatprep.subr.mxu0 0.0
    %732 = vmatpush1.xpose.msra.mxu0 0.0
    %733 = vmatprep.subr.mxu0 0.0
    %734 = vmatpush1.xpose.msra.mxu0 0.0
    %735 = vmatprep.subr.mxu0 0.0
    %736 = vmatpush1.xpose.msra.mxu0 0.0
    %737 = vmatprep.subr.mxu0 0.0
    %738 = vmatpush1.xpose.msra.mxu0 0.0
    %739 = vmatprep.subr.mxu0 0.0
    %740 = vmatpush1.xpose.msra.mxu0 0.0
    %741 = vmatprep.subr.mxu0 0.0
    %742 = vmatpush1.xpose.msra.mxu0 0.0
    %743 = vmatprep.subr.mxu0 0.0
    %744 = vmatpush1.xpose.msra.mxu0 0.0
    %745 = vmatprep.subr.mxu0 0.0
    %746 = vmatpush1.xpose.msra.mxu0 0.0
    %747 = vmatprep.subr.mxu0 0.0
    %748 = vmatpush1.xpose.msra.mxu0 0.0
    %749 = vmatprep.subr.mxu0 0.0
    %750 = vmatpush1.xpose.msra.mxu0 0.0
    %751 = vmatprep.subr.mxu0 0.0
    %752 = vmatpush1.xpose.msra.mxu0 0.0
    %753 = vmatprep.subr.mxu0 0.0
    %754 = vmatpush1.xpose.msra.mxu0 0.0
    %755 = vmatprep.subr.mxu0 0.0
    %756 = vmatpush1.xpose.msra.mxu0 0.0
    %757 = vmatprep.subr.mxu0 0.0
    %758 = vmatpush1.xpose.msra.mxu0 0.0
    %759 = vmatprep.subr.mxu0 0.0
    %760 = vmatpush1.xpose.msra.mxu0 0.0
    %761 = vmatprep.subr.mxu0 0.0
    %762 = vmatpush1.xpose.msra.mxu0 0.0
    %763 = vmatprep.subr.mxu0 0.0
    %764 = vmatpush1.xpose.msra.mxu0 0.0
    %765 = vmatprep.subr.mxu0 0.0
    %766 = vmatpush1.xpose.msra.mxu0 0.0
    %767 = vmatprep.subr.mxu0 0.0
    %768 = vmatpush1.xpose.msra.mxu0 0.0
    %769 = vmatprep.subr.mxu0 0.0
    %770 = vmatpush1.xpose.msra.mxu0 0.0
    %771 = vmatprep.subr.mxu0 0.0
    %772 = vmatpush1.xpose.msra.mxu0 0.0
    %773 = vmatprep.subr.mxu0 0.0
    %774 = vmatpush1.xpose.msra.mxu0 0.0
    %775 = vmatprep.subr.mxu0 0.0
    %776 = vmatpush1.xpose.msra.mxu0 0.0
    %777 = vmatprep.subr.mxu0 0.0
    %778 = vmatpush1.xpose.msra.mxu0 0.0
    %779 = vmatprep.subr.mxu0 0.0
    %780 = vmatpush1.xpose.msra.mxu0 0.0
    %781 = vmatprep.mubr.f32.mxu0 0.0
    %782 = vmatmul.mubr.f32.gmra.mrb[0].mxu0 %v713
    %v783 = vpop.f32.mrb[0].mxu0
    %v784 = vadd.f32 0.0, %v783
    %v785 = vpop.f32.mrb[0].mxu0
    %786 = vdwg.mxu0
    %787 = vrot.lane.b32.xlu0 %v211, 120
    %v788 = vpop.permute.xlu0 %787
    %789 = vrot.lane.b32.xlu0 %v296, 120
    %v790 = vpop.permute.xlu0 %789
    %v791 = vsel %vm388, %v788, 0
    %v793 = vsel %vm388, %v790, 0
    %795 = vmatprep.subr.mxu0 0.0
    %796 = vmatpush1.xpose.msra.mxu0 %v793
    %797 = vmatprep.subr.mxu0 0.0
    %798 = vmatpush1.xpose.msra.mxu0 0.0
    %799 = vmatprep.subr.mxu0 0.0
    %800 = vmatpush1.xpose.msra.mxu0 0.0
    %801 = vmatprep.subr.mxu0 0.0
    %802 = vmatpush1.xpose.msra.mxu0 0.0
    %803 = vmatprep.subr.mxu0 0.0
    %804 = vmatpush1.xpose.msra.mxu0 0.0
    %805 = vmatprep.subr.mxu0 0.0
    %806 = vmatpush1.xpose.msra.mxu0 0.0
    %807 = vmatprep.subr.mxu0 0.0
    %808 = vmatpush1.xpose.msra.mxu0 0.0
    %809 = vmatprep.subr.mxu0 0.0
    %810 = vmatpush1.xpose.msra.mxu0 0.0
    %811 = vmatprep.subr.mxu0 0.0
    %812 = vmatpush1.xpose.msra.mxu0 0.0
    %813 = vmatprep.subr.mxu0 0.0
    %814 = vmatpush1.xpose.msra.mxu0 0.0
    %815 = vmatprep.subr.mxu0 0.0
    %816 = vmatpush1.xpose.msra.mxu0 0.0
    %817 = vmatprep.subr.mxu0 0.0
    %818 = vmatpush1.xpose.msra.mxu0 0.0
    %819 = vmatprep.subr.mxu0 0.0
    %820 = vmatpush1.xpose.msra.mxu0 0.0
    %821 = vmatprep.subr.mxu0 0.0
    %822 = vmatpush1.xpose.msra.mxu0 0.0
    %823 = vmatprep.subr.mxu0 0.0
    %824 = vmatpush1.xpose.msra.mxu0 0.0
    %825 = vmatprep.subr.mxu0 0.0
    %826 = vmatpush1.xpose.msra.mxu0 0.0
    %827 = vmatprep.subr.mxu0 0.0
    %828 = vmatpush1.xpose.msra.mxu0 0.0
    %829 = vmatprep.subr.mxu0 0.0
    %830 = vmatpush1.xpose.msra.mxu0 0.0
    %831 = vmatprep.subr.mxu0 0.0
    %832 = vmatpush1.xpose.msra.mxu0 0.0
    %833 = vmatprep.subr.mxu0 0.0
    %834 = vmatpush1.xpose.msra.mxu0 0.0
    %835 = vmatprep.subr.mxu0 0.0
    %836 = vmatpush1.xpose.msra.mxu0 0.0
    %837 = vmatprep.subr.mxu0 0.0
    %838 = vmatpush1.xpose.msra.mxu0 0.0
    %839 = vmatprep.subr.mxu0 0.0
    %840 = vmatpush1.xpose.msra.mxu0 0.0
    %841 = vmatprep.subr.mxu0 0.0
    %842 = vmatpush1.xpose.msra.mxu0 0.0
    %843 = vmatprep.subr.mxu0 0.0
    %844 = vmatpush1.xpose.msra.mxu0 0.0
    %845 = vmatprep.subr.mxu0 0.0
    %846 = vmatpush1.xpose.msra.mxu0 0.0
    %847 = vmatprep.subr.mxu0 0.0
    %848 = vmatpush1.xpose.msra.mxu0 0.0
    %849 = vmatprep.subr.mxu0 0.0
    %850 = vmatpush1.xpose.msra.mxu0 0.0
    %851 = vmatprep.subr.mxu0 0.0
    %852 = vmatpush1.xpose.msra.mxu0 0.0
    %853 = vmatprep.subr.mxu0 0.0
    %854 = vmatpush1.xpose.msra.mxu0 0.0
    %855 = vmatprep.subr.mxu0 0.0
    %856 = vmatpush1.xpose.msra.mxu0 0.0
    %857 = vmatprep.subr.mxu0 0.0
    %858 = vmatpush1.xpose.msra.mxu0 0.0
    %859 = vmatprep.mubr.f32.mxu0 0.0
    %860 = vmatmul.mubr.f32.gmra.mrb[0].mxu0 %v791
    %v861 = vpop.f32.mrb[0].mxu0
    %v862 = vadd.f32 0.0, %v861
    %v863 = vpop.f32.mrb[0].mxu0
    %864 = vdwg.mxu0
    %v865 = vsel %vm388, %v784, -inf
    %866 = vmax.xlane.f32.xlu0 %v865
    %v867 = vpop.xlane.xlu0 %866
    %v868 = vsel %vm388, %v862, -inf
    %869 = vmax.xlane.f32.xlu0 %v868
    %v870 = vpop.xlane.xlu0 %869
    %v871 = vsub.f32 %v784, %v867
    %v872 = vsub.f32 %v862, %v870
    %v873 = vmul.f32 %v871, 1.442695
    %v874 = vpow.pop %v873
    %v875 = vmul.f32 %v872, 1.442695
    %v876 = vpow.pop %v875
    %v877 = vsel %vm388, %v874, 0.0
    %878 = vadd.xlane.f32.xlu0 %v877
    %v879 = vpop.xlane.xlu0 %878
    %v880 = vsel %vm388, %v876, 0.0
    %881 = vadd.xlane.f32.xlu0 %v880
    %v882 = vpop.xlane.xlu0 %881
    %v883 = vrcp.pop %v879
    %v884 = vrcp.pop %v882
    %v885 = vmul.f32 %v874, %v883
    %v886 = vmul.f32 %v876, %v884
    %888 = vrot.lane.b32.xlu0 %v376, 120
    %v889 = vpop.permute.xlu0 %888
    %v892 = vsel %vm388, %v885, 0
    %894 = vmatprep.subr.mxu0 0.0
    %895 = vmatpush1.msra.mxu0 %v889
    %896 = vmatprep.subr.mxu0 0.0
    %897 = vmatpush1.msra.mxu0 0.0
    %898 = vmatprep.subr.mxu0 0.0
    %899 = vmatpush1.msra.mxu0 0.0
    %900 = vmatprep.subr.mxu0 0.0
    %901 = vmatpush1.msra.mxu0 0.0
    %902 = vmatprep.subr.mxu0 0.0
    %903 = vmatpush1.msra.mxu0 0.0
    %904 = vmatprep.subr.mxu0 0.0
    %905 = vmatpush1.msra.mxu0 0.0
    %906 = vmatprep.subr.mxu0 0.0
    %907 = vmatpush1.msra.mxu0 0.0
    %908 = vmatprep.subr.mxu0 0.0
    %909 = vmatpush1.msra.mxu0 0.0
    %910 = vmatprep.subr.mxu0 0.0
    %911 = vmatpush1.msra.mxu0 0.0
    %912 = vmatprep.subr.mxu0 0.0
    %913 = vmatpush1.msra.mxu0 0.0
    %914 = vmatprep.subr.mxu0 0.0
    %915 = vmatpush1.msra.mxu0 0.0
    %916 = vmatprep.subr.mxu0 0.0
    %917 = vmatpush1.msra.mxu0 0.0
    %918 = vmatprep.subr.mxu0 0.0
    %919 = vmatpush1.msra.mxu0 0.0
    %920 = vmatprep.subr.mxu0 0.0
    %921 = vmatpush1.msra.mxu0 0.0
    %922 = vmatprep.subr.mxu0 0.0
    %923 = vmatpush1.msra.mxu0 0.0
    %924 = vmatprep.subr.mxu0 0.0
    %925 = vmatpush1.msra.mxu0 0.0
    %926 = vmatprep.subr.mxu0 0.0
    %927 = vmatpush1.msra.mxu0 0.0
    %928 = vmatprep.subr.mxu0 0.0
    %929 = vmatpush1.msra.mxu0 0.0
    %930 = vmatprep.subr.mxu0 0.0
    %931 = vmatpush1.msra.mxu0 0.0
    %932 = vmatprep.subr.mxu0 0.0
    %933 = vmatpush1.msra.mxu0 0.0
    %934 = vmatprep.subr.mxu0 0.0
    %935 = vmatpush1.msra.mxu0 0.0
    %936 = vmatprep.subr.mxu0 0.0
    %937 = vmatpush1.msra.mxu0 0.0
    %938 = vmatprep.subr.mxu0 0.0
    %939 = vmatpush1.msra.mxu0 0.0
    %940 = vmatprep.subr.mxu0 0.0
    %941 = vmatpush1.msra.mxu0 0.0
    %942 = vmatprep.subr.mxu0 0.0
    %943 = vmatpush1.msra.mxu0 0.0
    %944 = vmatprep.subr.mxu0 0.0
    %945 = vmatpush1.msra.mxu0 0.0
    %946 = vmatprep.subr.mxu0 0.0
    %947 = vmatpush1.msra.mxu0 0.0
    %948 = vmatprep.subr.mxu0 0.0
    %949 = vmatpush1.msra.mxu0 0.0
    %950 = vmatprep.subr.mxu0 0.0
    %951 = vmatpush1.msra.mxu0 0.0
    %952 = vmatprep.subr.mxu0 0.0
    %953 = vmatpush1.msra.mxu0 0.0
    %954 = vmatprep.subr.mxu0 0.0
    %955 = vmatpush1.msra.mxu0 0.0
    %956 = vmatprep.subr.mxu0 0.0
    %957 = vmatpush1.msra.mxu0 0.0
    %958 = vmatprep.mubr.f32.mxu0 0.0
    %959 = vmatmul.mubr.f32.gmra.mrb[0].mxu0 %v892
    %v960 = vpop.f32.mrb[0].mxu0
    %v961 = vadd.f32 0.0, %v960
    %v962 = vpop.f32.mrb[0].mxu0
    %963 = vdwg.mxu0
    %965 = vrot.lane.b32.xlu0 %v381, 120
    %v966 = vpop.permute.xlu0 %965
    %v969 = vsel %vm388, %v886, 0
    %971 = vmatprep.subr.mxu0 0.0
    %972 = vmatpush1.msra.mxu0 %v966
    %973 = vmatprep.subr.mxu0 0.0
    %974 = vmatpush1.msra.mxu0 0.0
    %975 = vmatprep.subr.mxu0 0.0
    %976 = vmatpush1.msra.mxu0 0.0
    %977 = vmatprep.subr.mxu0 0.0
    %978 = vmatpush1.msra.mxu0 0.0
    %979 = vmatprep.subr.mxu0 0.0
    %980 = vmatpush1.msra.mxu0 0.0
    %981 = vmatprep.subr.mxu0 0.0
    %982 = vmatpush1.msra.mxu0 0.0
    %983 = vmatprep.subr.mxu0 0.0
    %984 = vmatpush1.msra.mxu0 0.0
    %985 = vmatprep.subr.mxu0 0.0
    %986 = vmatpush1.msra.mxu0 0.0
    %987 = vmatprep.subr.mxu0 0.0
    %988 = vmatpush1.msra.mxu0 0.0
    %989 = vmatprep.subr.mxu0 0.0
    %990 = vmatpush1.msra.mxu0 0.0
    %991 = vmatprep.subr.mxu0 0.0
    %992 = vmatpush1.msra.mxu0 0.0
    %993 = vmatprep.subr.mxu0 0.0
    %994 = vmatpush1.msra.mxu0 0.0
    %995 = vmatprep.subr.mxu0 0.0
    %996 = vmatpush1.msra.mxu0 0.0
    %997 = vmatprep.subr.mxu0 0.0
    %998 = vmatpush1.msra.mxu0 0.0
    %999 = vmatprep.subr.mxu0 0.0
    %1000 = vmatpush1.msra.mxu0 0.0
    %1001 = vmatprep.subr.mxu0 0.0
    %1002 = vmatpush1.msra.mxu0 0.0
    %1003 = vmatprep.subr.mxu0 0.0
    %1004 = vmatpush1.msra.mxu0 0.0
    %1005 = vmatprep.subr.mxu0 0.0
    %1006 = vmatpush1.msra.mxu0 0.0
    %1007 = vmatprep.subr.mxu0 0.0
    %1008 = vmatpush1.msra.mxu0 0.0
    %1009 = vmatprep.subr.mxu0 0.0
    %1010 = vmatpush1.msra.mxu0 0.0
    %1011 = vmatprep.subr.mxu0 0.0
    %1012 = vmatpush1.msra.mxu0 0.0
    %1013 = vmatprep.subr.mxu0 0.0
    %1014 = vmatpush1.msra.mxu0 0.0
    %1015 = vmatprep.subr.mxu0 0.0
    %1016 = vmatpush1.msra.mxu0 0.0
    %1017 = vmatprep.subr.mxu0 0.0
    %1018 = vmatpush1.msra.mxu0 0.0
    %1019 = vmatprep.subr.mxu0 0.0
    %1020 = vmatpush1.msra.mxu0 0.0
    %1021 = vmatprep.subr.mxu0 0.0
    %1022 = vmatpush1.msra.mxu0 0.0
    %1023 = vmatprep.subr.mxu0 0.0
    %1024 = vmatpush1.msra.mxu0 0.0
    %1025 = vmatprep.subr.mxu0 0.0
    %1026 = vmatpush1.msra.mxu0 0.0
    %1027 = vmatprep.subr.mxu0 0.0
    %1028 = vmatpush1.msra.mxu0 0.0
    %1029 = vmatprep.subr.mxu0 0.0
    %1030 = vmatpush1.msra.mxu0 0.0
    %1031 = vmatprep.subr.mxu0 0.0
    %1032 = vmatpush1.msra.mxu0 0.0
    %1033 = vmatprep.subr.mxu0 0.0
    %1034 = vmatpush1.msra.mxu0 0.0
    %1035 = vmatprep.mubr.f32.mxu0 0.0
    %1036 = vmatmul.mubr.f32.gmra.mrb[0].mxu0 %v969
    %v1037 = vpop.f32.mrb[0].mxu0
    %v1038 = vadd.f32 0.0, %v1037
    %v1039 = vpop.f32.mrb[0].mxu0
    %1040 = vdwg.mxu0
    %v1042 = vsel %vm388, %v961, 0
    %v1045 = vsel %vm388, %v1038, 0
    %1047 = vmatprep.subr.mxu0 0.0
    %1048 = vmatpush1.msra.mxu0 %v385
    %1049 = vmatprep.subr.mxu0 0.0
    %1050 = vmatpush1.msra.mxu0 0.0
    %1051 = vmatprep.subr.mxu0 0.0
    %1052 = vmatpush1.msra.mxu0 0.0
    %1053 = vmatprep.subr.mxu0 0.0
    %1054 = vmatpush1.msra.mxu0 0.0
    %1055 = vmatprep.subr.mxu0 0.0
    %1056 = vmatpush1.msra.mxu0 0.0
    %1057 = vmatprep.subr.mxu0 0.0
    %1058 = vmatpush1.msra.mxu0 0.0
    %1059 = vmatprep.subr.mxu0 0.0
    %1060 = vmatpush1.msra.mxu0 0.0
    %1061 = vmatprep.subr.mxu0 0.0
    %1062 = vmatpush1.msra.mxu0 0.0
    %1063 = vmatprep.subr.mxu0 0.0
    %1064 = vmatpush1.msra.mxu0 0.0
    %1065 = vmatprep.subr.mxu0 0.0
    %1066 = vmatpush1.msra.mxu0 0.0
    %1067 = vmatprep.subr.mxu0 0.0
    %1068 = vmatpush1.msra.mxu0 0.0
    %1069 = vmatprep.subr.mxu0 0.0
    %1070 = vmatpush1.msra.mxu0 0.0
    %1071 = vmatprep.subr.mxu0 0.0
    %1072 = vmatpush1.msra.mxu0 0.0
    %1073 = vmatprep.subr.mxu0 0.0
    %1074 = vmatpush1.msra.mxu0 0.0
    %1075 = vmatprep.subr.mxu0 0.0
    %1076 = vmatpush1.msra.mxu0 0.0
    %1077 = vmatprep.subr.mxu0 0.0
    %1078 = vmatpush1.msra.mxu0 0.0
    %1079 = vmatprep.subr.mxu0 0.0
    %1080 = vmatpush1.msra.mxu0 0.0
    %1081 = vmatprep.subr.mxu0 0.0
    %1082 = vmatpush1.msra.mxu0 0.0
    %1083 = vmatprep.subr.mxu0 0.0
    %1084 = vmatpush1.msra.mxu0 0.0
    %1085 = vmatprep.subr.mxu0 0.0
    %1086 = vmatpush1.msra.mxu0 0.0
    %1087 = vmatprep.subr.mxu0 0.0
    %1088 = vmatpush1.msra.mxu0 0.0
    %1089 = vmatprep.subr.mxu0 0.0
    %1090 = vmatpush1.msra.mxu0 0.0
    %1091 = vmatprep.subr.mxu0 0.0
    %1092 = vmatpush1.msra.mxu0 0.0
    %1093 = vmatprep.subr.mxu0 0.0
    %1094 = vmatpush1.msra.mxu0 0.0
    %1095 = vmatprep.subr.mxu0 0.0
    %1096 = vmatpush1.msra.mxu0 0.0
    %1097 = vmatprep.subr.mxu0 0.0
    %1098 = vmatpush1.msra.mxu0 0.0
    %1099 = vmatprep.subr.mxu0 0.0
    %1100 = vmatpush1.msra.mxu0 0.0
    %1101 = vmatprep.subr.mxu0 0.0
    %1102 = vmatpush1.msra.mxu0 0.0
    %1103 = vmatprep.subr.mxu0 0.0
    %1104 = vmatpush1.msra.mxu0 0.0
    %1105 = vmatprep.subr.mxu0 0.0
    %1106 = vmatpush1.msra.mxu0 0.0
    %1107 = vmatprep.subr.mxu0 0.0
    %1108 = vmatpush1.msra.mxu0 0.0
    %1109 = vmatprep.subr.mxu0 0.0
    %1110 = vmatpush1.msra.mxu0 0.0
    %1111 = vmatprep.mubr.f32.mxu0 0.0
    %1112 = vmatmul.mubr.f32.gmra.mrb[0].mxu0 %v1042
    %v1113 = vpop.f32.mrb[0].mxu0
    %v1114 = vadd.f32 0.0, %v1113
    %v1115 = vpop.f32.mrb[0].mxu0
    %1116 = vmatprep.mubr.f32.mxu0 0.0
    %1117 = vmatmul.mubr.f32.gmra.mrb[0].mxu0 %v1045
    %v1118 = vpop.f32.mrb[0].mxu0
    %v1119 = vadd.f32 0.0, %v1118
    %v1120 = vpop.f32.mrb[0].mxu0
    %1121 = vdwg.mxu0
    %v1123 = vsel %vm388, %v633, 0
    %v1126 = vsel %vm388, %v706, 0
    %1128 = vmatprep.subr.mxu0 0.0
    %1129 = vmatpush1.msra.mxu0 %v384
    %1130 = vmatprep.subr.mxu0 0.0
    %1131 = vmatpush1.msra.mxu0 0.0
    %1132 = vmatprep.subr.mxu0 0.0
    %1133 = vmatpush1.msra.mxu0 0.0
    %1134 = vmatprep.subr.mxu0 0.0
    %1135 = vmatpush1.msra.mxu0 0.0
    %1136 = vmatprep.subr.mxu0 0.0
    %1137 = vmatpush1.msra.mxu0 0.0
    %1138 = vmatprep.subr.mxu0 0.0
    %1139 = vmatpush1.msra.mxu0 0.0
    %1140 = vmatprep.subr.mxu0 0.0
    %1141 = vmatpush1.msra.mxu0 0.0
    %1142 = vmatprep.subr.mxu0 0.0
    %1143 = vmatpush1.msra.mxu0 0.0
    %1144 = vmatprep.subr.mxu0 0.0
    %1145 = vmatpush1.msra.mxu0 0.0
    %1146 = vmatprep.subr.mxu0 0.0
    %1147 = vmatpush1.msra.mxu0 0.0
    %1148 = vmatprep.subr.mxu0 0.0
    %1149 = vmatpush1.msra.mxu0 0.0
    %1150 = vmatprep.subr.mxu0 0.0
    %1151 = vmatpush1.msra.mxu0 0.0
    %1152 = vmatprep.subr.mxu0 0.0
    %1153 = vmatpush1.msra.mxu0 0.0
    %1154 = vmatprep.subr.mxu0 0.0
    %1155 = vmatpush1.msra.mxu0 0.0
    %1156 = vmatprep.subr.mxu0 0.0
    %1157 = vmatpush1.msra.mxu0 0.0
    %1158 = vmatprep.subr.mxu0 0.0
    %1159 = vmatpush1.msra.mxu0 0.0
    %1160 = vmatprep.subr.mxu0 0.0
    %1161 = vmatpush1.msra.mxu0 0.0
    %1162 = vmatprep.subr.mxu0 0.0
    %1163 = vmatpush1.msra.mxu0 0.0
    %1164 = vmatprep.subr.mxu0 0.0
    %1165 = vmatpush1.msra.mxu0 0.0
    %1166 = vmatprep.subr.mxu0 0.0
    %1167 = vmatpush1.msra.mxu0 0.0
    %1168 = vmatprep.subr.mxu0 0.0
    %1169 = vmatpush1.msra.mxu0 0.0
    %1170 = vmatprep.subr.mxu0 0.0
    %1171 = vmatpush1.msra.mxu0 0.0
    %1172 = vmatprep.subr.mxu0 0.0
    %1173 = vmatpush1.msra.mxu0 0.0
    %1174 = vmatprep.subr.mxu0 0.0
    %1175 = vmatpush1.msra.mxu0 0.0
    %1176 = vmatprep.subr.mxu0 0.0
    %1177 = vmatpush1.msra.mxu0 0.0
    %1178 = vmatprep.subr.mxu0 0.0
    %1179 = vmatpush1.msra.mxu0 0.0
    %1180 = vmatprep.subr.mxu0 0.0
    %1181 = vmatpush1.msra.mxu0 0.0
    %1182 = vmatprep.subr.mxu0 0.0
    %1183 = vmatpush1.msra.mxu0 0.0
    %1184 = vmatprep.subr.mxu0 0.0
    %1185 = vmatpush1.msra.mxu0 0.0
    %1186 = vmatprep.subr.mxu0 0.0
    %1187 = vmatpush1.msra.mxu0 0.0
    %1188 = vmatprep.subr.mxu0 0.0
    %1189 = vmatpush1.msra.mxu0 0.0
    %1190 = vmatprep.subr.mxu0 0.0
    %1191 = vmatpush1.msra.mxu0 0.0
    %1192 = vmatprep.mubr.f32.mxu0 0.0
    %1193 = vmatmul.mubr.f32.gmra.mrb[0].mxu0 %v1123
    %v1194 = vpop.f32.mrb[0].mxu0
    %v1195 = vadd.f32 %v1114, %v1194
    %v1196 = vpop.f32.mrb[0].mxu0
    %1197 = vmatprep.mubr.f32.mxu0 0.0
    %1198 = vmatmul.mubr.f32.gmra.mrb[0].mxu0 %v1126
    %v1199 = vpop.f32.mrb[0].mxu0
    %v1200 = vadd.f32 %v1119, %v1199
    %v1201 = vpop.f32.mrb[0].mxu0
    %1202 = vdwg.mxu0
    %1203 = vrot.lane.b32.xlu0 %v206, 112
    %v1204 = vpop.permute.xlu0 %1203
    %1205 = vrot.lane.b32.xlu0 %v291, 112
    %v1206 = vpop.permute.xlu0 %1205
    %v1207 = vsel %vm388, %v1204, 0
    %v1209 = vsel %vm388, %v1206, 0
    %1211 = vmatprep.subr.mxu0 0.0
    %1212 = vmatpush1.xpose.msra.mxu0 %v1209
    %1213 = vmatprep.subr.mxu0 0.0
    %1214 = vmatpush1.xpose.msra.mxu0 0.0
    %1215 = vmatprep.subr.mxu0 0.0
    %1216 = vmatpush1.xpose.msra.mxu0 0.0
    %1217 = vmatprep.subr.mxu0 0.0
    %1218 = vmatpush1.xpose.msra.mxu0 0.0
    %1219 = vmatprep.subr.mxu0 0.0
    %1220 = vmatpush1.xpose.msra.mxu0 0.0
    %1221 = vmatprep.subr.mxu0 0.0
    %1222 = vmatpush1.xpose.msra.mxu0 0.0
    %1223 = vmatprep.subr.mxu0 0.0
    %1224 = vmatpush1.xpose.msra.mxu0 0.0
    %1225 = vmatprep.subr.mxu0 0.0
    %1226 = vmatpush1.xpose.msra.mxu0 0.0
    %1227 = vmatprep.subr.mxu0 0.0
    %1228 = vmatpush1.xpose.msra.mxu0 0.0
    %1229 = vmatprep.subr.mxu0 0.0
    %1230 = vmatpush1.xpose.msra.mxu0 0.0
    %1231 = vmatprep.subr.mxu0 0.0
    %1232 = vmatpush1.xpose.msra.mxu0 0.0
    %1233 = vmatprep.subr.mxu0 0.0
    %1234 = vmatpush1.xpose.msra.mxu0 0.0
    %1235 = vmatprep.subr.mxu0 0.0
    %1236 = vmatpush1.xpose.msra.mxu0 0.0
    %1237 = vmatprep.subr.mxu0 0.0
    %1238 = vmatpush1.xpose.msra.mxu0 0.0
    %1239 = vmatprep.subr.mxu0 0.0
    %1240 = vmatpush1.xpose.msra.mxu0 0.0
    %1241 = vmatprep.subr.mxu0 0.0
    %1242 = vmatpush1.xpose.msra.mxu0 0.0
    %1243 = vmatprep.subr.mxu0 0.0
    %1244 = vmatpush1.xpose.msra.mxu0 0.0
    %1245 = vmatprep.subr.mxu0 0.0
    %1246 = vmatpush1.xpose.msra.mxu0 0.0
    %1247 = vmatprep.subr.mxu0 0.0
    %1248 = vmatpush1.xpose.msra.mxu0 0.0
    %1249 = vmatprep.subr.mxu0 0.0
    %1250 = vmatpush1.xpose.msra.mxu0 0.0
    %1251 = vmatprep.subr.mxu0 0.0
    %1252 = vmatpush1.xpose.msra.mxu0 0.0
    %1253 = vmatprep.subr.mxu0 0.0
    %1254 = vmatpush1.xpose.msra.mxu0 0.0
    %1255 = vmatprep.subr.mxu0 0.0
    %1256 = vmatpush1.xpose.msra.mxu0 0.0
    %1257 = vmatprep.subr.mxu0 0.0
    %1258 = vmatpush1.xpose.msra.mxu0 0.0
    %1259 = vmatprep.subr.mxu0 0.0
    %1260 = vmatpush1.xpose.msra.mxu0 0.0
    %1261 = vmatprep.subr.mxu0 0.0
    %1262 = vmatpush1.xpose.msra.mxu0 0.0
    %1263 = vmatprep.subr.mxu0 0.0
    %1264 = vmatpush1.xpose.msra.mxu0 0.0
    %1265 = vmatprep.subr.mxu0 0.0
    %1266 = vmatpush1.xpose.msra.mxu0 0.0
    %1267 = vmatprep.subr.mxu0 0.0
    %1268 = vmatpush1.xpose.msra.mxu0 0.0
    %1269 = vmatprep.subr.mxu0 0.0
    %1270 = vmatpush1.xpose.msra.mxu0 0.0
    %1271 = vmatprep.subr.mxu0 0.0
    %1272 = vmatpush1.xpose.msra.mxu0 0.0
    %1273 = vmatprep.subr.mxu0 0.0
    %1274 = vmatpush1.xpose.msra.mxu0 0.0
    %1275 = vmatprep.mubr.f32.mxu0 0.0
    %1276 = vmatmul.mubr.f32.gmra.mrb[0].mxu0 %v1207
    %v1277 = vpop.f32.mrb[0].mxu0
    %v1278 = vadd.f32 0.0, %v1277
    %v1279 = vpop.f32.mrb[0].mxu0
    %1280 = vdwg.mxu0
    %1281 = vrot.lane.b32.xlu0 %v211, 112
    %v1282 = vpop.permute.xlu0 %1281
    %1283 = vrot.lane.b32.xlu0 %v296, 112
    %v1284 = vpop.permute.xlu0 %1283
    %v1285 = vsel %vm388, %v1282, 0
    %v1287 = vsel %vm388, %v1284, 0
    %1289 = vmatprep.subr.mxu0 0.0
    %1290 = vmatpush1.xpose.msra.mxu0 %v1287
    %1291 = vmatprep.subr.mxu0 0.0
    %1292 = vmatpush1.xpose.msra.mxu0 0.0
    %1293 = vmatprep.subr.mxu0 0.0
    %1294 = vmatpush1.xpose.msra.mxu0 0.0
    %1295 = vmatprep.subr.mxu0 0.0
    %1296 = vmatpush1.xpose.msra.mxu0 0.0
    %1297 = vmatprep.subr.mxu0 0.0
    %1298 = vmatpush1.xpose.msra.mxu0 0.0
    %1299 = vmatprep.subr.mxu0 0.0
    %1300 = vmatpush1.xpose.msra.mxu0 0.0
    %1301 = vmatprep.subr.mxu0 0.0
    %1302 = vmatpush1.xpose.msra.mxu0 0.0
    %1303 = vmatprep.subr.mxu0 0.0
    %1304 = vmatpush1.xpose.msra.mxu0 0.0
    %1305 = vmatprep.subr.mxu0 0.0
    %1306 = vmatpush1.xpose.msra.mxu0 0.0
    %1307 = vmatprep.subr.mxu0 0.0
    %1308 = vmatpush1.xpose.msra.mxu0 0.0
    %1309 = vmatprep.subr.mxu0 0.0
    %1310 = vmatpush1.xpose.msra.mxu0 0.0
    %1311 = vmatprep.subr.mxu0 0.0
    %1312 = vmatpush1.xpose.msra.mxu0 0.0
    %1313 = vmatprep.subr.mxu0 0.0
    %1314 = vmatpush1.xpose.msra.mxu0 0.0
    %1315 = vmatprep.subr.mxu0 0.0
    %1316 = vmatpush1.xpose.msra.mxu0 0.0
    %1317 = vmatprep.subr.mxu0 0.0
    %1318 = vmatpush1.xpose.msra.mxu0 0.0
    %1319 = vmatprep.subr.mxu0 0.0
    %1320 = vmatpush1.xpose.msra.mxu0 0.0
    %1321 = vmatprep.subr.mxu0 0.0
    %1322 = vmatpush1.xpose.msra.mxu0 0.0
    %1323 = vmatprep.subr.mxu0 0.0
    %1324 = vmatpush1.xpose.msra.mxu0 0.0
    %1325 = vmatprep.subr.mxu0 0.0
    %1326 = vmatpush1.xpose.msra.mxu0 0.0
    %1327 = vmatprep.subr.mxu0 0.0
    %1328 = vmatpush1.xpose.msra.mxu0 0.0
    %1329 = vmatprep.subr.mxu0 0.0
    %1330 = vmatpush1.xpose.msra.mxu0 0.0
    %1331 = vmatprep.subr.mxu0 0.0
    %1332 = vmatpush1.xpose.msra.mxu0 0.0
    %1333 = vmatprep.subr.mxu0 0.0
    %1334 = vmatpush1.xpose.msra.mxu0 0.0
    %1335 = vmatprep.subr.mxu0 0.0
    %1336 = vmatpush1.xpose.msra.mxu0 0.0
    %1337 = vmatprep.subr.mxu0 0.0
    %1338 = vmatpush1.xpose.msra.mxu0 0.0
    %1339 = vmatprep.subr.mxu0 0.0
    %1340 = vmatpush1.xpose.msra.mxu0 0.0
    %1341 = vmatprep.subr.mxu0 0.0
    %1342 = vmatpush1.xpose.msra.mxu0 0.0
    %1343 = vmatprep.subr.mxu0 0.0
    %1344 = vmatpush1.xpose.msra.mxu0 0.0
    %1345 = vmatprep.subr.mxu0 0.0
    %1346 = vmatpush1.xpose.msra.mxu0 0.0
    %1347 = vmatprep.subr.mxu0 0.0
    %1348 = vmatpush1.xpose.msra.mxu0 0.0
    %1349 = vmatprep.subr.mxu0 0.0
    %1350 = vmatpush1.xpose.msra.mxu0 0.0
    %1351 = vmatprep.subr.mxu0 0.0
    %1352 = vmatpush1.xpose.msra.mxu0 0.0
    %1353 = vmatprep.mubr.f32.mxu0 0.0
    %1354 = vmatmul.mubr.f32.gmra.mrb[0].mxu0 %v1285
    %v1355 = vpop.f32.mrb[0].mxu0
    %v1356 = vadd.f32 0.0, %v1355
    %v1357 = vpop.f32.mrb[0].mxu0
    %1358 = vdwg.mxu0
    %v1359 = vsel %vm388, %v1278, -inf
    %1360 = vmax.xlane.f32.xlu0 %v1359
    %v1361 = vpop.xlane.xlu0 %1360
    %v1362 = vsel %vm388, %v1356, -inf
    %1363 = vmax.xlane.f32.xlu0 %v1362
    %v1364 = vpop.xlane.xlu0 %1363
    %v1365 = vsub.f32 %v1278, %v1361
    %v1366 = vsub.f32 %v1356, %v1364
    %v1367 = vmul.f32 %v1365, 1.442695
    %v1368 = vpow.pop %v1367
    %v1369 = vmul.f32 %v1366, 1.442695
    %v1370 = vpow.pop %v1369
    %v1371 = vsel %vm388, %v1368, 0.0
    %1372 = vadd.xlane.f32.xlu0 %v1371
    %v1373 = vpop.xlane.xlu0 %1372
    %v1374 = vsel %vm388, %v1370, 0.0
    %1375 = vadd.xlane.f32.xlu0 %v1374
    %v1376 = vpop.xlane.xlu0 %1375
    %v1377 = vrcp.pop %v1373
    %v1378 = vrcp.pop %v1376
    %v1379 = vmul.f32 %v1368, %v1377
    %v1380 = vmul.f32 %v1370, %v1378
    %1381 = vrot.lane.b32.xlu0 %v376, 112
    %v1382 = vpop.permute.xlu0 %1381
    %v1385 = vsel %vm388, %v1379, 0
    %1387 = vmatprep.subr.mxu0 0.0
    %1388 = vmatpush1.msra.mxu0 %v1382
    %1389 = vmatprep.subr.mxu0 0.0
    %1390 = vmatpush1.msra.mxu0 0.0
    %1391 = vmatprep.subr.mxu0 0.0
    %1392 = vmatpush1.msra.mxu0 0.0
    %1393 = vmatprep.subr.mxu0 0.0
    %1394 = vmatpush1.msra.mxu0 0.0
    %1395 = vmatprep.subr.mxu0 0.0
    %1396 = vmatpush1.msra.mxu0 0.0
    %1397 = vmatprep.subr.mxu0 0.0
    %1398 = vmatpush1.msra.mxu0 0.0
    %1399 = vmatprep.subr.mxu0 0.0
    %1400 = vmatpush1.msra.mxu0 0.0
    %1401 = vmatprep.subr.mxu0 0.0
    %1402 = vmatpush1.msra.mxu0 0.0
    %1403 = vmatprep.subr.mxu0 0.0
    %1404 = vmatpush1.msra.mxu0 0.0
    %1405 = vmatprep.subr.mxu0 0.0
    %1406 = vmatpush1.msra.mxu0 0.0
    %1407 = vmatprep.subr.mxu0 0.0
    %1408 = vmatpush1.msra.mxu0 0.0
    %1409 = vmatprep.subr.mxu0 0.0
    %1410 = vmatpush1.msra.mxu0 0.0
    %1411 = vmatprep.subr.mxu0 0.0
    %1412 = vmatpush1.msra.mxu0 0.0
    %1413 = vmatprep.subr.mxu0 0.0
    %1414 = vmatpush1.msra.mxu0 0.0
    %1415 = vmatprep.subr.mxu0 0.0
    %1416 = vmatpush1.msra.mxu0 0.0
    %1417 = vmatprep.subr.mxu0 0.0
    %1418 = vmatpush1.msra.mxu0 0.0
    %1419 = vmatprep.subr.mxu0 0.0
    %1420 = vmatpush1.msra.mxu0 0.0
    %1421 = vmatprep.subr.mxu0 0.0
    %1422 = vmatpush1.msra.mxu0 0.0
    %1423 = vmatprep.subr.mxu0 0.0
    %1424 = vmatpush1.msra.mxu0 0.0
    %1425 = vmatprep.subr.mxu0 0.0
    %1426 = vmatpush1.msra.mxu0 0.0
    %1427 = vmatprep.subr.mxu0 0.0
    %1428 = vmatpush1.msra.mxu0 0.0
    %1429 = vmatprep.subr.mxu0 0.0
    %1430 = vmatpush1.msra.mxu0 0.0
    %1431 = vmatprep.subr.mxu0 0.0
    %1432 = vmatpush1.msra.mxu0 0.0
    %1433 = vmatprep.subr.mxu0 0.0
    %1434 = vmatpush1.msra.mxu0 0.0
    %1435 = vmatprep.subr.mxu0 0.0
    %1436 = vmatpush1.msra.mxu0 0.0
    %1437 = vmatprep.subr.mxu0 0.0
    %1438 = vmatpush1.msra.mxu0 0.0
    %1439 = vmatprep.subr.mxu0 0.0
    %1440 = vmatpush1.msra.mxu0 0.0
    %1441 = vmatprep.subr.mxu0 0.0
    %1442 = vmatpush1.msra.mxu0 0.0
    %1443 = vmatprep.subr.mxu0 0.0
    %1444 = vmatpush1.msra.mxu0 0.0
    %1445 = vmatprep.subr.mxu0 0.0
    %1446 = vmatpush1.msra.mxu0 0.0
    %1447 = vmatprep.subr.mxu0 0.0
    %1448 = vmatpush1.msra.mxu0 0.0
    %1449 = vmatprep.subr.mxu0 0.0
    %1450 = vmatpush1.msra.mxu0 0.0
    %1451 = vmatprep.mubr.f32.mxu0 0.0
    %1452 = vmatmul.mubr.f32.gmra.mrb[0].mxu0 %v1385
    %v1453 = vpop.f32.mrb[0].mxu0
    %v1454 = vadd.f32 0.0, %v1453
    %v1455 = vpop.f32.mrb[0].mxu0
    %1456 = vdwg.mxu0
    %1457 = vrot.lane.b32.xlu0 %v381, 112
    %v1458 = vpop.permute.xlu0 %1457
    %v1461 = vsel %vm388, %v1380, 0
    %1463 = vmatprep.subr.mxu0 0.0
    %1464 = vmatpush1.msra.mxu0 %v1458
    %1465 = vmatprep.subr.mxu0 0.0
    %1466 = vmatpush1.msra.mxu0 0.0
    %1467 = vmatprep.subr.mxu0 0.0
    %1468 = vmatpush1.msra.mxu0 0.0
    %1469 = vmatprep.subr.mxu0 0.0
    %1470 = vmatpush1.msra.mxu0 0.0
    %1471 = vmatprep.subr.mxu0 0.0
    %1472 = vmatpush1.msra.mxu0 0.0
    %1473 = vmatprep.subr.mxu0 0.0
    %1474 = vmatpush1.msra.mxu0 0.0
    %1475 = vmatprep.subr.mxu0 0.0
    %1476 = vmatpush1.msra.mxu0 0.0
    %1477 = vmatprep.subr.mxu0 0.0
    %1478 = vmatpush1.msra.mxu0 0.0
    %1479 = vmatprep.subr.mxu0 0.0
    %1480 = vmatpush1.msra.mxu0 0.0
    %1481 = vmatprep.subr.mxu0 0.0
    %1482 = vmatpush1.msra.mxu0 0.0
    %1483 = vmatprep.subr.mxu0 0.0
    %1484 = vmatpush1.msra.mxu0 0.0
    %1485 = vmatprep.subr.mxu0 0.0
    %1486 = vmatpush1.msra.mxu0 0.0
    %1487 = vmatprep.subr.mxu0 0.0
    %1488 = vmatpush1.msra.mxu0 0.0
    %1489 = vmatprep.subr.mxu0 0.0
    %1490 = vmatpush1.msra.mxu0 0.0
    %1491 = vmatprep.subr.mxu0 0.0
    %1492 = vmatpush1.msra.mxu0 0.0
    %1493 = vmatprep.subr.mxu0 0.0
    %1494 = vmatpush1.msra.mxu0 0.0
    %1495 = vmatprep.subr.mxu0 0.0
    %1496 = vmatpush1.msra.mxu0 0.0
    %1497 = vmatprep.subr.mxu0 0.0
    %1498 = vmatpush1.msra.mxu0 0.0
    %1499 = vmatprep.subr.mxu0 0.0
    %1500 = vmatpush1.msra.mxu0 0.0
    %1501 = vmatprep.subr.mxu0 0.0
    %1502 = vmatpush1.msra.mxu0 0.0
    %1503 = vmatprep.subr.mxu0 0.0
    %1504 = vmatpush1.msra.mxu0 0.0
    %1505 = vmatprep.subr.mxu0 0.0
    %1506 = vmatpush1.msra.mxu0 0.0
    %1507 = vmatprep.subr.mxu0 0.0
    %1508 = vmatpush1.msra.mxu0 0.0
    %1509 = vmatprep.subr.mxu0 0.0
    %1510 = vmatpush1.msra.mxu0 0.0
    %1511 = vmatprep.subr.mxu0 0.0
    %1512 = vmatpush1.msra.mxu0 0.0
    %1513 = vmatprep.subr.mxu0 0.0
    %1514 = vmatpush1.msra.mxu0 0.0
    %1515 = vmatprep.subr.mxu0 0.0
    %1516 = vmatpush1.msra.mxu0 0.0
    %1517 = vmatprep.subr.mxu0 0.0
    %1518 = vmatpush1.msra.mxu0 0.0
    %1519 = vmatprep.subr.mxu0 0.0
    %1520 = vmatpush1.msra.mxu0 0.0
    %1521 = vmatprep.subr.mxu0 0.0
    %1522 = vmatpush1.msra.mxu0 0.0
    %1523 = vmatprep.subr.mxu0 0.0
    %1524 = vmatpush1.msra.mxu0 0.0
    %1525 = vmatprep.subr.mxu0 0.0
    %1526 = vmatpush1.msra.mxu0 0.0
    %1527 = vmatprep.mubr.f32.mxu0 0.0
    %1528 = vmatmul.mubr.f32.gmra.mrb[0].mxu0 %v1461
    %v1529 = vpop.f32.mrb[0].mxu0
    %v1530 = vadd.f32 0.0, %v1529
    %v1531 = vpop.f32.mrb[0].mxu0
    %1532 = vdwg.mxu0
    %v1534 = vsel %vm388, %v1454, 0
    %v1537 = vsel %vm388, %v1530, 0
    %1539 = vmatprep.subr.mxu0 0.0
    %1540 = vmatpush1.msra.mxu0 %v386
    %1541 = vmatprep.subr.mxu0 0.0
    %1542 = vmatpush1.msra.mxu0 0.0
    %1543 = vmatprep.subr.mxu0 0.0
    %1544 = vmatpush1.msra.mxu0 0.0
    %1545 = vmatprep.subr.mxu0 0.0
    %1546 = vmatpush1.msra.mxu0 0.0
    %1547 = vmatprep.subr.mxu0 0.0
    %1548 = vmatpush1.msra.mxu0 0.0
    %1549 = vmatprep.subr.mxu0 0.0
    %1550 = vmatpush1.msra.mxu0 0.0
    %1551 = vmatprep.subr.mxu0 0.0
    %1552 = vmatpush1.msra.mxu0 0.0
    %1553 = vmatprep.subr.mxu0 0.0
    %1554 = vmatpush1.msra.mxu0 0.0
    %1555 = vmatprep.subr.mxu0 0.0
    %1556 = vmatpush1.msra.mxu0 0.0
    %1557 = vmatprep.subr.mxu0 0.0
    %1558 = vmatpush1.msra.mxu0 0.0
    %1559 = vmatprep.subr.mxu0 0.0
    %1560 = vmatpush1.msra.mxu0 0.0
    %1561 = vmatprep.subr.mxu0 0.0
    %1562 = vmatpush1.msra.mxu0 0.0
    %1563 = vmatprep.subr.mxu0 0.0
    %1564 = vmatpush1.msra.mxu0 0.0
    %1565 = vmatprep.subr.mxu0 0.0
    %1566 = vmatpush1.msra.mxu0 0.0
    %1567 = vmatprep.subr.mxu0 0.0
    %1568 = vmatpush1.msra.mxu0 0.0
    %1569 = vmatprep.subr.mxu0 0.0
    %1570 = vmatpush1.msra.mxu0 0.0
    %1571 = vmatprep.subr.mxu0 0.0
    %1572 = vmatpush1.msra.mxu0 0.0
    %1573 = vmatprep.subr.mxu0 0.0
    %1574 = vmatpush1.msra.mxu0 0.0
    %1575 = vmatprep.subr.mxu0 0.0
    %1576 = vmatpush1.msra.mxu0 0.0
    %1577 = vmatprep.subr.mxu0 0.0
    %1578 = vmatpush1.msra.mxu0 0.0
    %1579 = vmatprep.subr.mxu0 0.0
    %1580 = vmatpush1.msra.mxu0 0.0
    %1581 = vmatprep.subr.mxu0 0.0
    %1582 = vmatpush1.msra.mxu0 0.0
    %1583 = vmatprep.subr.mxu0 0.0
    %1584 = vmatpush1.msra.mxu0 0.0
    %1585 = vmatprep.subr.mxu0 0.0
    %1586 = vmatpush1.msra.mxu0 0.0
    %1587 = vmatprep.subr.mxu0 0.0
    %1588 = vmatpush1.msra.mxu0 0.0
    %1589 = vmatprep.subr.mxu0 0.0
    %1590 = vmatpush1.msra.mxu0 0.0
    %1591 = vmatprep.subr.mxu0 0.0
    %1592 = vmatpush1.msra.mxu0 0.0
    %1593 = vmatprep.subr.mxu0 0.0
    %1594 = vmatpush1.msra.mxu0 0.0
    %1595 = vmatprep.subr.mxu0 0.0
    %1596 = vmatpush1.msra.mxu0 0.0
    %1597 = vmatprep.subr.mxu0 0.0
    %1598 = vmatpush1.msra.mxu0 0.0
    %1599 = vmatprep.subr.mxu0 0.0
    %1600 = vmatpush1.msra.mxu0 0.0
    %1601 = vmatprep.subr.mxu0 0.0
    %1602 = vmatpush1.msra.mxu0 0.0
    %1603 = vmatprep.mubr.f32.mxu0 0.0
    %1604 = vmatmul.mubr.f32.gmra.mrb[0].mxu0 %v1534
    %v1605 = vpop.f32.mrb[0].mxu0
    %v1606 = vadd.f32 0.0, %v1605
    %v1607 = vpop.f32.mrb[0].mxu0
    %1608 = vmatprep.mubr.f32.mxu0 0.0
    %1609 = vmatmul.mubr.f32.gmra.mrb[0].mxu0 %v1537
    %v1610 = vpop.f32.mrb[0].mxu0
    %v1611 = vadd.f32 0.0, %v1610
    %v1612 = vpop.f32.mrb[0].mxu0
    %1613 = vdwg.mxu0
    %v1614 = vadd.f32 %v1195, %v1606
    %v1615 = vadd.f32 %v1200, %v1611
    %1616 = vrot.lane.b32.xlu0 %v206, 104
    %v1617 = vpop.permute.xlu0 %1616
    %1618 = vrot.lane.b32.xlu0 %v291, 104
    %v1619 = vpop.permute.xlu0 %1618
    %v1620 = vsel %vm388, %v1617, 0
    %v1622 = vsel %vm388, %v1619, 0
    %1624 = vmatprep.subr.mxu0 0.0
    %1625 = vmatpush1.xpose.msra.mxu0 %v1622
    %1626 = vmatprep.subr.mxu0 0.0
    %1627 = vmatpush1.xpose.msra.mxu0 0.0
    %1628 = vmatprep.subr.mxu0 0.0
    %1629 = vmatpush1.xpose.msra.mxu0 0.0
    %1630 = vmatprep.subr.mxu0 0.0
    %1631 = vmatpush1.xpose.msra.mxu0 0.0
    %1632 = vmatprep.subr.mxu0 0.0
    %1633 = vmatpush1.xpose.msra.mxu0 0.0
    %1634 = vmatprep.subr.mxu0 0.0
    %1635 = vmatpush1.xpose.msra.mxu0 0.0
    %1636 = vmatprep.subr.mxu0 0.0
    %1637 = vmatpush1.xpose.msra.mxu0 0.0
    %1638 = vmatprep.subr.mxu0 0.0
    %1639 = vmatpush1.xpose.msra.mxu0 0.0
    %1640 = vmatprep.subr.mxu0 0.0
    %1641 = vmatpush1.xpose.msra.mxu0 0.0
    %1642 = vmatprep.subr.mxu0 0.0
    %1643 = vmatpush1.xpose.msra.mxu0 0.0
    %1644 = vmatprep.subr.mxu0 0.0
    %1645 = vmatpush1.xpose.msra.mxu0 0.0
    %1646 = vmatprep.subr.mxu0 0.0
    %1647 = vmatpush1.xpose.msra.mxu0 0.0
    %1648 = vmatprep.subr.mxu0 0.0
    %1649 = vmatpush1.xpose.msra.mxu0 0.0
    %1650 = vmatprep.subr.mxu0 0.0
    %1651 = vmatpush1.xpose.msra.mxu0 0.0
    %1652 = vmatprep.subr.mxu0 0.0
    %1653 = vmatpush1.xpose.msra.mxu0 0.0
    %1654 = vmatprep.subr.mxu0 0.0
    %1655 = vmatpush1.xpose.msra.mxu0 0.0
    %1656 = vmatprep.subr.mxu0 0.0
    %1657 = vmatpush1.xpose.msra.mxu0 0.0
    %1658 = vmatprep.subr.mxu0 0.0
    %1659 = vmatpush1.xpose.msra.mxu0 0.0
    %1660 = vmatprep.subr.mxu0 0.0
    %1661 = vmatpush1.xpose.msra.mxu0 0.0
    %1662 = vmatprep.subr.mxu0 0.0
    %1663 = vmatpush1.xpose.msra.mxu0 0.0
    %1664 = vmatprep.subr.mxu0 0.0
    %1665 = vmatpush1.xpose.msra.mxu0 0.0
    %1666 = vmatprep.subr.mxu0 0.0
    %1667 = vmatpush1.xpose.msra.mxu0 0.0
    %1668 = vmatprep.subr.mxu0 0.0
    %1669 = vmatpush1.xpose.msra.mxu0 0.0
    %1670 = vmatprep.subr.mxu0 0.0
    %1671 = vmatpush1.xpose.msra.mxu0 0.0
    %1672 = vmatprep.subr.mxu0 0.0
    %1673 = vmatpush1.xpose.msra.mxu0 0.0
    %1674 = vmatprep.subr.mxu0 0.0
    %1675 = vmatpush1.xpose.msra.mxu0 0.0
    %1676 = vmatprep.subr.mxu0 0.0
    %1677 = vmatpush1.xpose.msra.mxu0 0.0
    %1678 = vmatprep.subr.mxu0 0.0
    %1679 = vmatpush1.xpose.msra.mxu0 0.0
    %1680 = vmatprep.subr.mxu0 0.0
    %1681 = vmatpush1.xpose.msra.mxu0 0.0
    %1682 = vmatprep.subr.mxu0 0.0
    %1683 = vmatpush1.xpose.msra.mxu0 0.0
    %1684 = vmatprep.subr.mxu0 0.0
    %1685 = vmatpush1.xpose.msra.mxu0 0.0
    %1686 = vmatprep.subr.mxu0 0.0
    %1687 = vmatpush1.xpose.msra.mxu0 0.0
    %1688 = vmatprep.mubr.f32.mxu0 0.0
    %1689 = vmatmul.mubr.f32.gmra.mrb[0].mxu0 %v1620
    %v1690 = vpop.f32.mrb[0].mxu0
    %v1691 = vadd.f32 0.0, %v1690
    %v1692 = vpop.f32.mrb[0].mxu0
    %1693 = vdwg.mxu0
    %1694 = vrot.lane.b32.xlu0 %v211, 104
    %v1695 = vpop.permute.xlu0 %1694
    %1696 = vrot.lane.b32.xlu0 %v296, 104
    %v1697 = vpop.permute.xlu0 %1696
    %v1698 = vsel %vm388, %v1695, 0
    %v1700 = vsel %vm388, %v1697, 0
    %1702 = vmatprep.subr.mxu0 0.0
    %1703 = vmatpush1.xpose.msra.mxu0 %v1700
    %1704 = vmatprep.subr.mxu0 0.0
    %1705 = vmatpush1.xpose.msra.mxu0 0.0
    %1706 = vmatprep.subr.mxu0 0.0
    %1707 = vmatpush1.xpose.msra.mxu0 0.0
    %1708 = vmatprep.subr.mxu0 0.0
    %1709 = vmatpush1.xpose.msra.mxu0 0.0
    %1710 = vmatprep.subr.mxu0 0.0
    %1711 = vmatpush1.xpose.msra.mxu0 0.0
    %1712 = vmatprep.subr.mxu0 0.0
    %1713 = vmatpush1.xpose.msra.mxu0 0.0
    %1714 = vmatprep.subr.mxu0 0.0
    %1715 = vmatpush1.xpose.msra.mxu0 0.0
    %1716 = vmatprep.subr.mxu0 0.0
    %1717 = vmatpush1.xpose.msra.mxu0 0.0
    %1718 = vmatprep.subr.mxu0 0.0
    %1719 = vmatpush1.xpose.msra.mxu0 0.0
    %1720 = vmatprep.subr.mxu0 0.0
    %1721 = vmatpush1.xpose.msra.mxu0 0.0
    %1722 = vmatprep.subr.mxu0 0.0
    %1723 = vmatpush1.xpose.msra.mxu0 0.0
    %1724 = vmatprep.subr.mxu0 0.0
    %1725 = vmatpush1.xpose.msra.mxu0 0.0
    %1726 = vmatprep.subr.mxu0 0.0
    %1727 = vmatpush1.xpose.msra.mxu0 0.0
    %1728 = vmatprep.subr.mxu0 0.0
    %1729 = vmatpush1.xpose.msra.mxu0 0.0
    %1730 = vmatprep.subr.mxu0 0.0
    %1731 = vmatpush1.xpose.msra.mxu0 0.0
    %1732 = vmatprep.subr.mxu0 0.0
    %1733 = vmatpush1.xpose.msra.mxu0 0.0
    %1734 = vmatprep.subr.mxu0 0.0
    %1735 = vmatpush1.xpose.msra.mxu0 0.0
    %1736 = vmatprep.subr.mxu0 0.0
    %1737 = vmatpush1.xpose.msra.mxu0 0.0
    %1738 = vmatprep.subr.mxu0 0.0
    %1739 = vmatpush1.xpose.msra.mxu0 0.0
    %1740 = vmatprep.subr.mxu0 0.0
    %1741 = vmatpush1.xpose.msra.mxu0 0.0
    %1742 = vmatprep.subr.mxu0 0.0
    %1743 = vmatpush1.xpose.msra.mxu0 0.0
    %1744 = vmatprep.subr.mxu0 0.0
    %1745 = vmatpush1.xpose.msra.mxu0 0.0
    %1746 = vmatprep.subr.mxu0 0.0
    %1747 = vmatpush1.xpose.msra.mxu0 0.0
    %1748 = vmatprep.subr.mxu0 0.0
    %1749 = vmatpush1.xpose.msra.mxu0 0.0
    %1750 = vmatprep.subr.mxu0 0.0
    %1751 = vmatpush1.xpose.msra.mxu0 0.0
    %1752 = vmatprep.subr.mxu0 0.0
    %1753 = vmatpush1.xpose.msra.mxu0 0.0
    %1754 = vmatprep.subr.mxu0 0.0
    %1755 = vmatpush1.xpose.msra.mxu0 0.0
    %1756 = vmatprep.subr.mxu0 0.0
    %1757 = vmatpush1.xpose.msra.mxu0 0.0
    %1758 = vmatprep.subr.mxu0 0.0
    %1759 = vmatpush1.xpose.msra.mxu0 0.0
    %1760 = vmatprep.subr.mxu0 0.0
    %1761 = vmatpush1.xpose.msra.mxu0 0.0
    %1762 = vmatprep.subr.mxu0 0.0
    %1763 = vmatpush1.xpose.msra.mxu0 0.0
    %1764 = vmatprep.subr.mxu0 0.0
    %1765 = vmatpush1.xpose.msra.mxu0 0.0
    %1766 = vmatprep.mubr.f32.mxu0 0.0
    %1767 = vmatmul.mubr.f32.gmra.mrb[0].mxu0 %v1698
    %v1768 = vpop.f32.mrb[0].mxu0
    %v1769 = vadd.f32 0.0, %v1768
    %v1770 = vpop.f32.mrb[0].mxu0
    %1771 = vdwg.mxu0
    %v1772 = vsel %vm388, %v1691, -inf
    %1773 = vmax.xlane.f32.xlu0 %v1772
    %v1774 = vpop.xlane.xlu0 %1773
    %v1775 = vsel %vm388, %v1769, -inf
    %1776 = vmax.xlane.f32.xlu0 %v1775
    %v1777 = vpop.xlane.xlu0 %1776
    %v1778 = vsub.f32 %v1691, %v1774
    %v1779 = vsub.f32 %v1769, %v1777
    %v1780 = vmul.f32 %v1778, 1.442695
    %v1781 = vpow.pop %v1780
    %v1782 = vmul.f32 %v1779, 1.442695
    %v1783 = vpow.pop %v1782
    %v1784 = vsel %vm388, %v1781, 0.0
    %1785 = vadd.xlane.f32.xlu0 %v1784
    %v1786 = vpop.xlane.xlu0 %1785
    %v1787 = vsel %vm388, %v1783, 0.0
    %1788 = vadd.xlane.f32.xlu0 %v1787
    %v1789 = vpop.xlane.xlu0 %1788
    %v1790 = vrcp.pop %v1786
    %v1791 = vrcp.pop %v1789
    %v1792 = vmul.f32 %v1781, %v1790
    %v1793 = vmul.f32 %v1783, %v1791
    %1794 = vrot.lane.b32.xlu0 %v376, 104
    %v1795 = vpop.permute.xlu0 %1794
    %v1798 = vsel %vm388, %v1792, 0
    %1800 = vmatprep.subr.mxu0 0.0
    %1801 = vmatpush1.msra.mxu0 %v1795
    %1802 = vmatprep.subr.mxu0 0.0
    %1803 = vmatpush1.msra.mxu0 0.0
    %1804 = vmatprep.subr.mxu0 0.0
    %1805 = vmatpush1.msra.mxu0 0.0
    %1806 = vmatprep.subr.mxu0 0.0
    %1807 = vmatpush1.msra.mxu0 0.0
    %1808 = vmatprep.subr.mxu0 0.0
    %1809 = vmatpush1.msra.mxu0 0.0
    %1810 = vmatprep.subr.mxu0 0.0
    %1811 = vmatpush1.msra.mxu0 0.0
    %1812 = vmatprep.subr.mxu0 0.0
    %1813 = vmatpush1.msra.mxu0 0.0
    %1814 = vmatprep.subr.mxu0 0.0
    %1815 = vmatpush1.msra.mxu0 0.0
    %1816 = vmatprep.subr.mxu0 0.0
    %1817 = vmatpush1.msra.mxu0 0.0
    %1818 = vmatprep.subr.mxu0 0.0
    %1819 = vmatpush1.msra.mxu0 0.0
    %1820 = vmatprep.subr.mxu0 0.0
    %1821 = vmatpush1.msra.mxu0 0.0
    %1822 = vmatprep.subr.mxu0 0.0
    %1823 = vmatpush1.msra.mxu0 0.0
    %1824 = vmatprep.subr.mxu0 0.0
    %1825 = vmatpush1.msra.mxu0 0.0
    %1826 = vmatprep.subr.mxu0 0.0
    %1827 = vmatpush1.msra.mxu0 0.0
    %1828 = vmatprep.subr.mxu0 0.0
    %1829 = vmatpush1.msra.mxu0 0.0
    %1830 = vmatprep.subr.mxu0 0.0
    %1831 = vmatpush1.msra.mxu0 0.0
    %1832 = vmatprep.subr.mxu0 0.0
    %1833 = vmatpush1.msra.mxu0 0.0
    %1834 = vmatprep.subr.mxu0 0.0
    %1835 = vmatpush1.msra.mxu0 0.0
    %1836 = vmatprep.subr.mxu0 0.0
    %1837 = vmatpush1.msra.mxu0 0.0
    %1838 = vmatprep.subr.mxu0 0.0
    %1839 = vmatpush1.msra.mxu0 0.0
    %1840 = vmatprep.subr.mxu0 0.0
    %1841 = vmatpush1.msra.mxu0 0.0
    %1842 = vmatprep.subr.mxu0 0.0
    %1843 = vmatpush1.msra.mxu0 0.0
    %1844 = vmatprep.subr.mxu0 0.0
    %1845 = vmatpush1.msra.mxu0 0.0
    %1846 = vmatprep.subr.mxu0 0.0
    %1847 = vmatpush1.msra.mxu0 0.0
    %1848 = vmatprep.subr.mxu0 0.0
    %1849 = vmatpush1.msra.mxu0 0.0
    %1850 = vmatprep.subr.mxu0 0.0
    %1851 = vmatpush1.msra.mxu0 0.0
    %1852 = vmatprep.subr.mxu0 0.0
    %1853 = vmatpush1.msra.mxu0 0.0
    %1854 = vmatprep.subr.mxu0 0.0
    %1855 = vmatpush1.msra.mxu0 0.0
    %1856 = vmatprep.subr.mxu0 0.0
    %1857 = vmatpush1.msra.mxu0 0.0
    %1858 = vmatprep.subr.mxu0 0.0
    %1859 = vmatpush1.msra.mxu0 0.0
    %1860 = vmatprep.subr.mxu0 0.0
    %1861 = vmatpush1.msra.mxu0 0.0
    %1862 = vmatprep.subr.mxu0 0.0
    %1863 = vmatpush1.msra.mxu0 0.0
    %1864 = vmatprep.mubr.f32.mxu0 0.0
    %1865 = vmatmul.mubr.f32.gmra.mrb[0].mxu0 %v1798
    %v1866 = vpop.f32.mrb[0].mxu0
    %v1867 = vadd.f32 0.0, %v1866
    %v1868 = vpop.f32.mrb[0].mxu0
    %1869 = vdwg.mxu0
    %1870 = vrot.lane.b32.xlu0 %v381, 104
    %v1871 = vpop.permute.xlu0 %1870
    %v1874 = vsel %vm388, %v1793, 0
    %1876 = vmatprep.subr.mxu0 0.0
    %1877 = vmatpush1.msra.mxu0 %v1871
    %1878 = vmatprep.subr.mxu0 0.0
    %1879 = vmatpush1.msra.mxu0 0.0
    %1880 = vmatprep.subr.mxu0 0.0
    %1881 = vmatpush1.msra.mxu0 0.0
    %1882 = vmatprep.subr.mxu0 0.0
    %1883 = vmatpush1.msra.mxu0 0.0
    %1884 = vmatprep.subr.mxu0 0.0
    %1885 = vmatpush1.msra.mxu0 0.0
    %1886 = vmatprep.subr.mxu0 0.0
    %1887 = vmatpush1.msra.mxu0 0.0
    %1888 = vmatprep.subr.mxu0 0.0
    %1889 = vmatpush1.msra.mxu0 0.0
    %1890 = vmatprep.subr.mxu0 0.0
    %1891 = vmatpush1.msra.mxu0 0.0
    %1892 = vmatprep.subr.mxu0 0.0
    %1893 = vmatpush1.msra.mxu0 0.0
    %1894 = vmatprep.subr.mxu0 0.0
    %1895 = vmatpush1.msra.mxu0 0.0
    %1896 = vmatprep.subr.mxu0 0.0
    %1897 = vmatpush1.msra.mxu0 0.0
    %1898 = vmatprep.subr.mxu0 0.0
    %1899 = vmatpush1.msra.mxu0 0.0
    %1900 = vmatprep.subr.mxu0 0.0
    %1901 = vmatpush1.msra.mxu0 0.0
    %1902 = vmatprep.subr.mxu0 0.0
    %1903 = vmatpush1.msra.mxu0 0.0
    %1904 = vmatprep.subr.mxu0 0.0
    %1905 = vmatpush1.msra.mxu0 0.0
    %1906 = vmatprep.subr.mxu0 0.0
    %1907 = vmatpush1.msra.mxu0 0.0
    %1908 = vmatprep.subr.mxu0 0.0
    %1909 = vmatpush1.msra.mxu0 0.0
    %1910 = vmatprep.subr.mxu0 0.0
    %1911 = vmatpush1.msra.mxu0 0.0
    %1912 = vmatprep.subr.mxu0 0.0
    %1913 = vmatpush1.msra.mxu0 0.0
    %1914 = vmatprep.subr.mxu0 0.0
    %1915 = vmatpush1.msra.mxu0 0.0
    %1916 = vmatprep.subr.mxu0 0.0
    %1917 = vmatpush1.msra.mxu0 0.0
    %1918 = vmatprep.subr.mxu0 0.0
    %1919 = vmatpush1.msra.mxu0 0.0
    %1920 = vmatprep.subr.mxu0 0.0
    %1921 = vmatpush1.msra.mxu0 0.0
    %1922 = vmatprep.subr.mxu0 0.0
    %1923 = vmatpush1.msra.mxu0 0.0
    %1924 = vmatprep.subr.mxu0 0.0
    %1925 = vmatpush1.msra.mxu0 0.0
    %1926 = vmatprep.subr.mxu0 0.0
    %1927 = vmatpush1.msra.mxu0 0.0
    %1928 = vmatprep.subr.mxu0 0.0
    %1929 = vmatpush1.msra.mxu0 0.0
    %1930 = vmatprep.subr.mxu0 0.0
    %1931 = vmatpush1.msra.mxu0 0.0
    %1932 = vmatprep.subr.mxu0 0.0
    %1933 = vmatpush1.msra.mxu0 0.0
    %1934 = vmatprep.subr.mxu0 0.0
    %1935 = vmatpush1.msra.mxu0 0.0
    %1936 = vmatprep.subr.mxu0 0.0
    %1937 = vmatpush1.msra.mxu0 0.0
    %1938 = vmatprep.subr.mxu0 0.0
    %1939 = vmatpush1.msra.mxu0 0.0
    %1940 = vmatprep.mubr.f32.mxu0 0.0
    %1941 = vmatmul.mubr.f32.gmra.mrb[0].mxu0 %v1874
    %v1942 = vpop.f32.mrb[0].mxu0
    %v1943 = vadd.f32 0.0, %v1942
    %v1944 = vpop.f32.mrb[0].mxu0
    %1945 = vdwg.mxu0
    %v1947 = vsel %vm388, %v1867, 0
    %v1950 = vsel %vm388, %v1943, 0
    %1952 = vmatprep.subr.mxu0 0.0
    %1953 = vmatpush1.msra.mxu0 %v387
    %1954 = vmatprep.subr.mxu0 0.0
    %1955 = vmatpush1.msra.mxu0 0.0
    %1956 = vmatprep.subr.mxu0 0.0
    %1957 = vmatpush1.msra.mxu0 0.0
    %1958 = vmatprep.subr.mxu0 0.0
    %1959 = vmatpush1.msra.mxu0 0.0
    %1960 = vmatprep.subr.mxu0 0.0
    %1961 = vmatpush1.msra.mxu0 0.0
    %1962 = vmatprep.subr.mxu0 0.0
    %1963 = vmatpush1.msra.mxu0 0.0
    %1964 = vmatprep.subr.mxu0 0.0
    %1965 = vmatpush1.msra.mxu0 0.0
    %1966 = vmatprep.subr.mxu0 0.0
    %1967 = vmatpush1.msra.mxu0 0.0
    %1968 = vmatprep.subr.mxu0 0.0
    %1969 = vmatpush1.msra.mxu0 0.0
    %1970 = vmatprep.subr.mxu0 0.0
    %1971 = vmatpush1.msra.mxu0 0.0
    %1972 = vmatprep.subr.mxu0 0.0
    %1973 = vmatpush1.msra.mxu0 0.0
    %1974 = vmatprep.subr.mxu0 0.0
    %1975 = vmatpush1.msra.mxu0 0.0
    %1976 = vmatprep.subr.mxu0 0.0
    %1977 = vmatpush1.msra.mxu0 0.0
    %1978 = vmatprep.subr.mxu0 0.0
    %1979 = vmatpush1.msra.mxu0 0.0
    %1980 = vmatprep.subr.mxu0 0.0
    %1981 = vmatpush1.msra.mxu0 0.0
    %1982 = vmatprep.subr.mxu0 0.0
    %1983 = vmatpush1.msra.mxu0 0.0
    %1984 = vmatprep.subr.mxu0 0.0
    %1985 = vmatpush1.msra.mxu0 0.0
    %1986 = vmatprep.subr.mxu0 0.0
    %1987 = vmatpush1.msra.mxu0 0.0
    %1988 = vmatprep.subr.mxu0 0.0
    %1989 = vmatpush1.msra.mxu0 0.0
    %1990 = vmatprep.subr.mxu0 0.0
    %1991 = vmatpush1.msra.mxu0 0.0
    %1992 = vmatprep.subr.mxu0 0.0
    %1993 = vmatpush1.msra.mxu0 0.0
    %1994 = vmatprep.subr.mxu0 0.0
    %1995 = vmatpush1.msra.mxu0 0.0
    %1996 = vmatprep.subr.mxu0 0.0
    %1997 = vmatpush1.msra.mxu0 0.0
    %1998 = vmatprep.subr.mxu0 0.0
    %1999 = vmatpush1.msra.mxu0 0.0
    %2000 = vmatprep.subr.mxu0 0.0
    %2001 = vmatpush1.msra.mxu0 0.0
    %2002 = vmatprep.subr.mxu0 0.0
    %2003 = vmatpush1.msra.mxu0 0.0
    %2004 = vmatprep.subr.mxu0 0.0
    %2005 = vmatpush1.msra.mxu0 0.0
    %2006 = vmatprep.subr.mxu0 0.0
    %2007 = vmatpush1.msra.mxu0 0.0
    %2008 = vmatprep.subr.mxu0 0.0
    %2009 = vmatpush1.msra.mxu0 0.0
    %2010 = vmatprep.subr.mxu0 0.0
    %2011 = vmatpush1.msra.mxu0 0.0
    %2012 = vmatprep.subr.mxu0 0.0
    %2013 = vmatpush1.msra.mxu0 0.0
    %2014 = vmatprep.subr.mxu0 0.0
    %2015 = vmatpush1.msra.mxu0 0.0
    %2016 = vmatprep.mubr.f32.mxu0 0.0
    %2017 = vmatmul.mubr.f32.gmra.mrb[0].mxu0 %v1947
    %v2018 = vpop.f32.mrb[0].mxu0
    %v2019 = vadd.f32 0.0, %v2018
    %v2020 = vpop.f32.mrb[0].mxu0
    %2021 = vmatprep.mubr.f32.mxu0 0.0
    %2022 = vmatmul.mubr.f32.gmra.mrb[0].mxu0 %v1950
    %v2023 = vpop.f32.mrb[0].mxu0
    %v2024 = vadd.f32 0.0, %v2023
    %v2025 = vpop.f32.mrb[0].mxu0
    %2026 = vdwg.mxu0
    %v2027 = vadd.f32 %v1614, %v2019
    %v2028 = vadd.f32 %v1615, %v2024
    %v2029 = vld [vmem:[%s7] sm:$0x1]
    %v2031 = vlaneseq
    %v2032 = vshrl.u32 %v2031, 7
    %v2033 = vsub.s32 0, %v2032
    %v2034 = vrot.slane %v2029, %v2033
    %v2036 = vadd.f32 %v2027, %v2034
    %v2037 = vadd.f32 %v2028, %v2034
    %v2038 = vadd.f32 %v2036, %v122
    %v2039 = vadd.f32 %v2037, %v123
    %v2040 = vld [vmem:[%s8] sm:$0x1]
    %v2041 = vld [vmem:[%s9] sm:$0x1]
    %v2042 = vsel %vm132, %v2038, 0.0
    %2043 = vadd.xlane.f32.xlu0 %v2042
    %v2044 = vpop.xlane.xlu0 %2043
    %v2045 = vsel %vm132, %v2039, 0.0
    %2046 = vadd.xlane.f32.xlu0 %v2045
    %v2047 = vpop.xlane.xlu0 %2046
    %v2048 = vrcp.pop 32.0
    %v2049 = vmul.f32 %v2044, %v2048
    %v2050 = vmul.f32 %v2047, %v2048
    %v2051 = vsub.f32 %v2038, %v2049
    %v2052 = vsub.f32 %v2039, %v2050
    %v2053 = vmul.f32 %v2051, %v2051
    %v2054 = vmul.f32 %v2052, %v2052
    %v2055 = vsel %vm132, %v2053, 0.0
    %2056 = vadd.xlane.f32.xlu0 %v2055
    %v2057 = vpop.xlane.xlu0 %2056
    %v2058 = vsel %vm132, %v2054, 0.0
    %2059 = vadd.xlane.f32.xlu0 %v2058
    %v2060 = vpop.xlane.xlu0 %2059
    %v2061 = vmul.f32 %v2057, %v2048
    %v2062 = vmul.f32 %v2060, %v2048
    %v2063 = vadd.f32 %v2061, 1e-05
    %v2064 = vadd.f32 %v2062, 1e-05
    %v2065 = vrsqrt.pop %v2063
    %v2066 = vrsqrt.pop %v2064
    %v2067 = vmul.f32 %v2051, %v2065
    %v2068 = vmul.f32 %v2052, %v2066
    %v2070 = vlaneseq
    %v2071 = vshrl.u32 %v2070, 7
    %v2072 = vsub.s32 0, %v2071
    %v2073 = vrot.slane %v2040, %v2072
    %v2075 = vmul.f32 %v2067, %v2073
    %v2076 = vmul.f32 %v2068, %v2073
    %v2078 = vlaneseq
    %v2079 = vshrl.u32 %v2078, 7
    %v2080 = vsub.s32 0, %v2079
    %v2081 = vrot.slane %v2041, %v2080
    %v2083 = vadd.f32 %v2075, %v2081
    %v2084 = vadd.f32 %v2076, %v2081
    %v2085 = vld [vmem:[#allocation10] sm:$0xff]
    %v2086 = vld [vmem:[#allocation10 + $0x8] sm:$0xff]
    %v2087 = vld [vmem:[#allocation10 + $0x10] sm:$0xff]
    %v2088 = vld [vmem:[#allocation10 + $0x18] sm:$0xff]
    %v2089 = vld [vmem:[%s11] sm:$0x1]
    %v2091 = vlaneseq
    %v2092 = vshrl.u32 %v2091, 7
    %v2093 = vsub.s32 0, %v2092
    %v2094 = vrot.slane %v2089, %v2093
    %v2097 = vsel %vm132, %v2083, 0
    %v2100 = vsel %vm132, %v2084, 0
    %2102 = vmatprep.subr.mxu0 0.0
    %2103 = vmatpush1.msra.mxu0 %v2085
    %2104 = vmatprep.subr.mxu0 0.0
    %2105 = vmatpush1.msra.mxu0 %v2086
    %2106 = vmatprep.subr.mxu0 0.0
    %2107 = vmatpush1.msra.mxu0 %v2087
    %2108 = vmatprep.subr.mxu0 0.0
    %2109 = vmatpush1.msra.mxu0 %v2088
    %2110 = vmatprep.subr.mxu0 0.0
    %2111 = vmatpush1.msra.mxu0 0.0
    %2112 = vmatprep.subr.mxu0 0.0
    %2113 = vmatpush1.msra.mxu0 0.0
    %2114 = vmatprep.subr.mxu0 0.0
    %2115 = vmatpush1.msra.mxu0 0.0
    %2116 = vmatprep.subr.mxu0 0.0
    %2117 = vmatpush1.msra.mxu0 0.0
    %2118 = vmatprep.subr.mxu0 0.0
    %2119 = vmatpush1.msra.mxu0 0.0
    %2120 = vmatprep.subr.mxu0 0.0
    %2121 = vmatpush1.msra.mxu0 0.0
    %2122 = vmatprep.subr.mxu0 0.0
    %2123 = vmatpush1.msra.mxu0 0.0
    %2124 = vmatprep.subr.mxu0 0.0
    %2125 = vmatpush1.msra.mxu0 0.0
    %2126 = vmatprep.subr.mxu0 0.0
    %2127 = vmatpush1.msra.mxu0 0.0
    %2128 = vmatprep.subr.mxu0 0.0
    %2129 = vmatpush1.msra.mxu0 0.0
    %2130 = vmatprep.subr.mxu0 0.0
    %2131 = vmatpush1.msra.mxu0 0.0
    %2132 = vmatprep.subr.mxu0 0.0
    %2133 = vmatpush1.msra.mxu0 0.0
    %2134 = vmatprep.subr.mxu0 0.0
    %2135 = vmatpush1.msra.mxu0 0.0
    %2136 = vmatprep.subr.mxu0 0.0
    %2137 = vmatpush1.msra.mxu0 0.0
    %2138 = vmatprep.subr.mxu0 0.0
    %2139 = vmatpush1.msra.mxu0 0.0
    %2140 = vmatprep.subr.mxu0 0.0
    %2141 = vmatpush1.msra.mxu0 0.0
    %2142 = vmatprep.subr.mxu0 0.0
    %2143 = vmatpush1.msra.mxu0 0.0
    %2144 = vmatprep.subr.mxu0 0.0
    %2145 = vmatpush1.msra.mxu0 0.0
    %2146 = vmatprep.subr.mxu0 0.0
    %2147 = vmatpush1.msra.mxu0 0.0
    %2148 = vmatprep.subr.mxu0 0.0
    %2149 = vmatpush1.msra.mxu0 0.0
    %2150 = vmatprep.subr.mxu0 0.0
    %2151 = vmatpush1.msra.mxu0 0.0
    %2152 = vmatprep.subr.mxu0 0.0
    %2153 = vmatpush1.msra.mxu0 0.0
    %2154 = vmatprep.subr.mxu0 0.0
    %2155 = vmatpush1.msra.mxu0 0.0
    %2156 = vmatprep.subr.mxu0 0.0
    %2157 = vmatpush1.msra.mxu0 0.0
    %2158 = vmatprep.subr.mxu0 0.0
    %2159 = vmatpush1.msra.mxu0 0.0
    %2160 = vmatprep.subr.mxu0 0.0
    %2161 = vmatpush1.msra.mxu0 0.0
    %2162 = vmatprep.subr.mxu0 0.0
    %2163 = vmatpush1.msra.mxu0 0.0
    %2164 = vmatprep.subr.mxu0 0.0
    %2165 = vmatpush1.msra.mxu0 0.0
    %2166 = vmatprep.mubr.f32.mxu0 0.0
    %2167 = vmatmul.mubr.f32.gmra.mrb[0].mxu0 %v2097
    %v2168 = vpop.f32.mrb[0].mxu0
    %v2169 = vadd.f32 %v2094, %v2168
    %v2170 = vpop.f32.mrb[0].mxu0
    %2171 = vmatprep.mubr.f32.mxu0 0.0
    %2172 = vmatmul.mubr.f32.gmra.mrb[0].mxu0 %v2100
    %v2173 = vpop.f32.mrb[0].mxu0
    %v2174 = vadd.f32 %v2094, %v2173
    %v2175 = vpop.f32.mrb[0].mxu0
    %2176 = vdwg.mxu0
    %v2177 = vmax.f32 %v2169, 0.0
    %v2178 = vmax.f32 %v2174, 0.0
    %v2179 = vld [vmem:[%s12] sm:$0xff]
    %v2180 = vld [vmem:[%s12 + $0x8] sm:$0xff]
    %v2181 = vld [vmem:[%s12 + $0x10] sm:$0xff]
    %v2182 = vld [vmem:[%s12 + $0x18] sm:$0xff]
    %v2183 = vld [vmem:[%s12 + $0x20] sm:$0xff]
    %v2184 = vld [vmem:[%s12 + $0x28] sm:$0xff]
    %v2185 = vld [vmem:[%s12 + $0x30] sm:$0xff]
    %v2186 = vld [vmem:[%s12 + $0x38] sm:$0xff]
    %v2187 = vld [vmem:[%s13] sm:$0x1]
    %v2189 = vlaneseq
    %v2190 = vshrl.u32 %v2189, 7
    %v2191 = vsub.s32 0, %v2190
    %v2192 = vrot.slane %v2187, %v2191
    %vm2194 = vcmask 523264
    %v2196 = vsel %vm2194, %v2177, 0
    %v2199 = vsel %vm2194, %v2178, 0
    %2201 = vmatprep.subr.mxu0 0.0
    %2202 = vmatpush1.msra.mxu0 %v2179
    %2203 = vmatprep.subr.mxu0 0.0
    %2204 = vmatpush1.msra.mxu0 %v2180
    %2205 = vmatprep.subr.mxu0 0.0
    %2206 = vmatpush1.msra.mxu0 %v2181
    %2207 = vmatprep.subr.mxu0 0.0
    %2208 = vmatpush1.msra.mxu0 %v2182
    %2209 = vmatprep.subr.mxu0 0.0
    %2210 = vmatpush1.msra.mxu0 %v2183
    %2211 = vmatprep.subr.mxu0 0.0
    %2212 = vmatpush1.msra.mxu0 %v2184
    %2213 = vmatprep.subr.mxu0 0.0
    %2214 = vmatpush1.msra.mxu0 %v2185
    %2215 = vmatprep.subr.mxu0 0.0
    %2216 = vmatpush1.msra.mxu0 %v2186
    %2217 = vmatprep.subr.mxu0 0.0
    %2218 = vmatpush1.msra.mxu0 0.0
    %2219 = vmatprep.subr.mxu0 0.0
    %2220 = vmatpush1.msra.mxu0 0.0
    %2221 = vmatprep.subr.mxu0 0.0
    %2222 = vmatpush1.msra.mxu0 0.0
    %2223 = vmatprep.subr.mxu0 0.0
    %2224 = vmatpush1.msra.mxu0 0.0
    %2225 = vmatprep.subr.mxu0 0.0
    %2226 = vmatpush1.msra.mxu0 0.0
    %2227 = vmatprep.subr.mxu0 0.0
    %2228 = vmatpush1.msra.mxu0 0.0
    %2229 = vmatprep.subr.mxu0 0.0
    %2230 = vmatpush1.msra.mxu0 0.0
    %2231 = vmatprep.subr.mxu0 0.0
    %2232 = vmatpush1.msra.mxu0 0.0
    %2233 = vmatprep.subr.mxu0 0.0
    %2234 = vmatpush1.msra.mxu0 0.0
    %2235 = vmatprep.subr.mxu0 0.0
    %2236 = vmatpush1.msra.mxu0 0.0
    %2237 = vmatprep.subr.mxu0 0.0
    %2238 = vmatpush1.msra.mxu0 0.0
    %2239 = vmatprep.subr.mxu0 0.0
    %2240 = vmatpush1.msra.mxu0 0.0
    %2241 = vmatprep.subr.mxu0 0.0
    %2242 = vmatpush1.msra.mxu0 0.0
    %2243 = vmatprep.subr.mxu0 0.0
    %2244 = vmatpush1.msra.mxu0 0.0
    %2245 = vmatprep.subr.mxu0 0.0
    %2246 = vmatpush1.msra.mxu0 0.0
    %2247 = vmatprep.subr.mxu0 0.0
    %2248 = vmatpush1.msra.mxu0 0.0
    %2249 = vmatprep.subr.mxu0 0.0
    %2250 = vmatpush1.msra.mxu0 0.0
    %2251 = vmatprep.subr.mxu0 0.0
    %2252 = vmatpush1.msra.mxu0 0.0
    %2253 = vmatprep.subr.mxu0 0.0
    %2254 = vmatpush1.msra.mxu0 0.0
    %2255 = vmatprep.subr.mxu0 0.0
    %2256 = vmatpush1.msra.mxu0 0.0
    %2257 = vmatprep.subr.mxu0 0.0
    %2258 = vmatpush1.msra.mxu0 0.0
    %2259 = vmatprep.subr.mxu0 0.0
    %2260 = vmatpush1.msra.mxu0 0.0
    %2261 = vmatprep.subr.mxu0 0.0
    %2262 = vmatpush1.msra.mxu0 0.0
    %2263 = vmatprep.subr.mxu0 0.0
    %2264 = vmatpush1.msra.mxu0 0.0
    %2265 = vmatprep.mubr.f32.mxu0 0.0
    %2266 = vmatmul.mubr.f32.gmra.mrb[0].mxu0 %v2196
    %v2267 = vpop.f32.mrb[0].mxu0
    %v2268 = vadd.f32 %v2192, %v2267
    %v2269 = vpop.f32.mrb[0].mxu0
    %2270 = vmatprep.mubr.f32.mxu0 0.0
    %2271 = vmatmul.mubr.f32.gmra.mrb[0].mxu0 %v2199
    %v2272 = vpop.f32.mrb[0].mxu0
    %v2273 = vadd.f32 %v2192, %v2272
    %v2274 = vpop.f32.mrb[0].mxu0
    %2275 = vdwg.mxu0
    %v2276 = vadd.f32 %v2268, %v2083
    %v2277 = vadd.f32 %v2273, %v2084
    %v2278 = vld [vmem:[%s14] sm:$0x1]
    %v2279 = vld [vmem:[%s15] sm:$0x1]
    %v2280 = vsel %vm132, %v2276, 0.0
    %2281 = vadd.xlane.f32.xlu0 %v2280
    %v2282 = vpop.xlane.xlu0 %2281
    %v2283 = vsel %vm132, %v2277, 0.0
    %2284 = vadd.xlane.f32.xlu0 %v2283
    %v2285 = vpop.xlane.xlu0 %2284
    %v2286 = vmul.f32 %v2282, %v2048
    %v2287 = vmul.f32 %v2285, %v2048
    %v2288 = vsub.f32 %v2276, %v2286
    %v2289 = vsub.f32 %v2277, %v2287
    %v2290 = vmul.f32 %v2288, %v2288
    %v2291 = vmul.f32 %v2289, %v2289
    %v2292 = vsel %vm132, %v2290, 0.0
    %2293 = vadd.xlane.f32.xlu0 %v2292
    %v2294 = vpop.xlane.xlu0 %2293
    %v2295 = vsel %vm132, %v2291, 0.0
    %2296 = vadd.xlane.f32.xlu0 %v2295
    %v2297 = vpop.xlane.xlu0 %2296
    %v2298 = vmul.f32 %v2294, %v2048
    %v2299 = vmul.f32 %v2297, %v2048
    %v2300 = vadd.f32 %v2298, 1e-05
    %v2301 = vadd.f32 %v2299, 1e-05
    %v2302 = vrsqrt.pop %v2300
    %v2303 = vrsqrt.pop %v2301
    %v2304 = vmul.f32 %v2288, %v2302
    %v2305 = vmul.f32 %v2289, %v2303
    %v2307 = vlaneseq
    %v2308 = vshrl.u32 %v2307, 7
    %v2309 = vsub.s32 0, %v2308
    %v2310 = vrot.slane %v2278, %v2309
    %v2312 = vmul.f32 %v2304, %v2310
    %v2313 = vmul.f32 %v2305, %v2310
    %v2315 = vlaneseq
    %v2316 = vshrl.u32 %v2315, 7
    %v2317 = vsub.s32 0, %v2316
    %v2318 = vrot.slane %v2279, %v2317
    %v2320 = vadd.f32 %v2312, %v2318
    %v2321 = vadd.f32 %v2313, %v2318
    %2322 = vst.msk [vmem:[#allocation11] sm:$0xff] %vm132, %v2320
    %2323 = vst.msk [vmem:[#allocation11 + $0x8] sm:$0xff] %vm132, %v2321
    // Predicated region
    $region86: #{tpu_custom_call.1} parent=1 // pred_check
      _
    $region87: #{tpu_custom_call.1} parent=1 // pred_check_branch
      %2325 = sbr.rel (0) target = $region89
    $region88: #{tpu_custom_call.1} parent=1 // pred_region
      %s2327 = ssub.s32 256, 256
      %2328 = vsyncadd [#allocation4], %s2327
      %s2329 = sshll.u32 [#allocation11], 4
      %s2330 = int_to_ptr.vmem [resolvable:$true] %s2329
      %2335 = dma.vmem_to_hbm [thread:$0]  %s2330, 256, %s16, [#allocation4], 128, 128, 8
    $region89: #{tpu_custom_call.1} parent=1 // pred_fallthru
      _
    // Predicated region
    $region90: #{tpu_custom_call.1} parent=1 // pred_check
      _
    $region91: #{tpu_custom_call.1} parent=1 // pred_check_branch
      %2337 = sbr.rel (0) target = $region93
    $region92: #{tpu_custom_call.1} parent=1 // pred_region
      %2338 = dma.done [#allocation4], 256
    $region93: #{tpu_custom_call.1} parent=1 // pred_fallthru
      _
    %2339 = vsyncpa [#allocation3], 1
    %2340 = vsyncpa [#allocation6], 1
    %2341 = vsyncpa [#allocation9], 1
    %2342 = vsyncpa [#allocation4], 1

</llo_original>
